<compile_context>
chip_gen: v7x
topology: tpu7x:2x2x1
jax: 0.10.0
libtpu: 0.0.40
codegen_flags: <defaults>
</compile_context>

<pallas_src>
import math

import jax
import jax.numpy as jnp
from jax.experimental import pallas as pl
from jax.experimental.pallas import tpu as pltpu

GATE_PAD = 128   # lane-align each GRU gate to the 128-lane vreg width
SUBLANE = 8      # sublane-align the batch


def gru_kernel(x_ref, h0_ref, wih_ref, whh_ref, bih_ref, bhn_ref,
               wout_ref, bout_ref, logp_ref, hout_ref):
    """Single-invocation GRU forward + Linear + LogSoftmax.

    Shapes (already padded / laid out by the wrapper):
      x_ref   : (T*Bp, I)    flattened, batch-padded input sequence
      h0_ref  : (Bp, Hp)     initial hidden, lanes >= H are 0 (f32)
      wih_ref : (I, 3*Hp)    W_ih^T, each gate zero-padded H->Hp (f32)
      whh_ref : (Hp, 3*Hp)   W_hh^T, zero-padded, bfloat16
      bih_ref : (1, 3*Hp)    b_ih with b_hr/b_hz folded in, zero-padded (f32)
      bhn_ref : (1, Hp)      b_hn, zero-padded (f32)
      wout_ref: (Hp, O)      W_out^T, rows >= H are 0 (f32)
      bout_ref: (1, O)
      logp_ref: (Bp, O)      log-softmax output
      hout_ref: (Bp, Hp)     final hidden (padded; wrapper slices back to (B, H))
    """
    Bp, Hp = h0_ref.shape
    T = x_ref.shape[0] // Bp

    # --- off the serial critical path: input projection for ALL timesteps in one f32 matmul ---
    # b_hr / b_hz are already folded into bih, so r/z need no bias work inside the loop.
    gi_all = (jnp.dot(x_ref[...], wih_ref[...], preferred_element_type=jnp.float32)
              + bih_ref[...])                                               # (T*Bp, 3*Hp)

    whh = whh_ref[...]                                                      # (Hp, 3*Hp) bf16
    # Hoisted, one-time broadcast of b_hn (JAX does not CSE broadcast_in_dim).
    bhn = jnp.broadcast_to(bhn_ref[...], (Bp, Hp))                          # (Bp, Hp) f32
    h = h0_ref[...]                                                         # (Bp, Hp) f32

    # --- serial recurrence, fully unrolled (T static & small); one bf16 MXU matmul per step ---
    for t in range(T):
        gi = gi_all[t * Bp:(t + 1) * Bp, :]                # whole 8-sublane block, static slice
        gh = jnp.dot(h.astype(jnp.bfloat16), whh,
                     preferred_element_type=jnp.float32)                    # (Bp, 3*Hp)
        # sigmoid(x) == 0.5*(tanh(x/2)+1): keeps the nonlinearity on the EUP (no f32 divide).
        r = 0.5 * (jnp.tanh(0.5 * (gi[:, 0:Hp] + gh[:, 0:Hp])) + 1.0)
        z = 0.5 * (jnp.tanh(0.5 * (gi[:, Hp:2 * Hp] + gh[:, Hp:2 * Hp])) + 1.0)
        n = jnp.tanh(gi[:, 2 * Hp:3 * Hp] + r * (gh[:, 2 * Hp:3 * Hp] + bhn))  # b_hn inside r*(.)
        h = (1.0 - z) * n + z * h

    hout_ref[...] = h.astype(hout_ref.dtype)

    # --- classifier head: Linear + numerically-stable LogSoftmax (runs once per call) ---
    logits = jnp.dot(h, wout_ref[...], preferred_element_type=jnp.float32) + bout_ref[...]
    m = jnp.max(logits, axis=1, keepdims=True)
    lse = m + jnp.log(jnp.sum(jnp.exp(logits - m), axis=1, keepdims=True))
    logp_ref[...] = (logits - lse).astype(logp_ref.dtype)


def _pad_gate_cols(w, H, Hp):
    """(rows, 3H) -> (rows, 3*Hp): zero-pad each gate chunk from H to Hp lanes."""
    rows = w.shape[0]
    w3 = w.reshape(rows, 3, H)
    return jnp.pad(w3, ((0, 0), (0, 0), (0, Hp - H))).reshape(rows, 3 * Hp)


@jax.jit
def gru_forward(x, h0, wih_t, whh_t, bih, bhh, wout_t, bout):
    """x: (T, B, I); h0: (1, B, H); weights pre-transposed:
       wih_t (I, 3H), whh_t (H, 3H), bih/bhh (1, 3H), wout_t (H, O), bout (1, O).
    Returns (log_probs (B, O), final_hidden (1, B, H)) — matches the PyTorch GRU module forward."""
    T, B, I = x.shape
    H = h0.shape[-1]
    O = wout_t.shape[-1]
    Hp = -(-H // GATE_PAD) * GATE_PAD     # lane-aligned gate width
    Bp = -(-B // SUBLANE) * SUBLANE       # sublane-aligned batch

    # Fold the purely-additive b_hr / b_hz into b_ih (exact per the GRU equations); keep b_hn
    # separate — it sits inside r * (W_hn h + b_hn).
    bih_fold = jnp.concatenate([bih[:, :2 * H] + bhh[:, :2 * H], bih[:, 2 * H:]], axis=1)
    bhn = bhh[:, 2 * H:]

    # Lane/sublane-aligned, zero-padded parameter layout (done once under jit; padded lanes are
    # exact zeros so the GRU math on real lanes is unchanged and padded h lanes stay 0).
    wih_p = _pad_gate_cols(wih_t, H, Hp)                                     # (I, 3Hp) f32
    whh_p = jnp.pad(_pad_gate_cols(whh_t, H, Hp),
                    ((0, Hp - H), (0, 0))).astype(jnp.bfloat16)              # (Hp, 3Hp) bf16
    bih_p = _pad_gate_cols(bih_fold, H, Hp)                                  # (1, 3Hp) f32
    bhn_p = jnp.pad(bhn, ((0, 0), (0, Hp - H)))                              # (1, Hp) f32
    wout_p = jnp.pad(wout_t, ((0, Hp - H), (0, 0)))                          # (Hp, O) f32
    h0_p = jnp.pad(h0[0], ((0, Bp - B), (0, Hp - H)))                        # (Bp, Hp) f32
    x2d = jnp.pad(x, ((0, 0), (0, Bp - B), (0, 0))).reshape(T * Bp, I)       # (T*Bp, I) f32

    vmem = pl.BlockSpec(memory_space=pltpu.MemorySpace.VMEM)  # whole-array resident in VMEM
    logp, h_pad = pl.pallas_call(
        gru_kernel,
        out_shape=(jax.ShapeDtypeStruct((Bp, O), jnp.float32),
                   jax.ShapeDtypeStruct((Bp, Hp), jnp.float32)),
        in_specs=[vmem] * 8,
        out_specs=(vmem, vmem),
    )(x2d, h0_p, wih_p, whh_p, bih_p, bhn_p, wout_p, bout)

    return logp[:B], h_pad[None, :B, :H]


def gru_forward_ref(x, h0, wih_t, whh_t, bih, bhh, wout_t, bout, recurrent_dtype=None):
    """Pure-JAX reference mirroring torch nn.GRU + Linear + LogSoftmax.
    If recurrent_dtype is set, the recurrent matmul operands are rounded to that dtype
    (to match the kernel's bf16 recurrent path for a tight correctness check)."""
    H = h0.shape[-1]
    h = h0[0]
    whh_c = whh_t.astype(recurrent_dtype) if recurrent_dtype is not None else whh_t
    for t in range(x.shape[0]):
        gi = x[t] @ wih_t + bih
        if recurrent_dtype is not None:
            gh = jnp.dot(h.astype(recurrent_dtype), whh_c,
                         preferred_element_type=jnp.float32) + bhh
        else:
            gh = h @ whh_t + bhh
        r = jax.nn.sigmoid(gi[:, :H] + gh[:, :H])
        z = jax.nn.sigmoid(gi[:, H:2 * H] + gh[:, H:2 * H])
        n = jnp.tanh(gi[:, 2 * H:] + r * gh[:, 2 * H:])
        h = (1.0 - z) * n + z * h
    logits = h @ wout_t + bout
    return jax.nn.log_softmax(logits, axis=1), h[None]


if __name__ == "__main__":
    # Small shapes consistent with the module's forward (seq-major, like nn.GRU default).
    T, B, I, H, O = 8, 2, 16, 32, 8

    key = jax.random.PRNGKey(0)
    ks = jax.random.split(key, 8)
    bound = 1.0 / math.sqrt(H)  # PyTorch default init scale for GRU/Linear

    # Parameters (stored pre-transposed for the kernel's row-major matmuls).
    wih_t = jax.random.uniform(ks[0], (I, 3 * H), jnp.float32, -bound, bound)
    whh_t = jax.random.uniform(ks[1], (H, 3 * H), jnp.float32, -bound, bound)
    bih = jax.random.uniform(ks[2], (1, 3 * H), jnp.float32, -bound, bound)
    bhh = jax.random.uniform(ks[3], (1, 3 * H), jnp.float32, -bound, bound)
    wout_t = jax.random.uniform(ks[4], (H, O), jnp.float32, -bound, bound)
    bout = jax.random.uniform(ks[5], (1, O), jnp.float32, -bound, bound)

    # Inputs: random sequence and zero initial hidden (initHidden()).
    x = jax.random.normal(ks[6], (T, B, I), jnp.float32)
    h0 = jnp.zeros((1, B, H), jnp.float32)

    logp, h_final = gru_forward(x, h0, wih_t, whh_t, bih, bhh, wout_t, bout)
    jax.block_until_ready((logp, h_final))
    assert logp.shape == (B, O) and h_final.shape == (1, B, H)

    # Tight check vs. a reference that applies the same bf16 rounding on the recurrent matmul.
    logp_m, h_m = gru_forward_ref(x, h0, wih_t, whh_t, bih, bhh, wout_t, bout,
                                  recurrent_dtype=jnp.bfloat16)
    assert jnp.allclose(logp, logp_m, atol=5e-4), "log-probs mismatch vs bf16-matched reference"
    assert jnp.allclose(h_final, h_m, atol=5e-4), "hidden mismatch vs bf16-matched reference"

    # Sanity check vs. the full-f32 PyTorch-equivalent reference (looser: bf16 recurrent weights).
    logp_ref, h_ref = gru_forward_ref(x, h0, wih_t, whh_t, bih, bhh, wout_t, bout)
    assert jnp.allclose(logp, logp_ref, atol=5e-2), "log-probs mismatch vs f32 reference"
    assert jnp.allclose(h_final, h_ref, atol=5e-2), "hidden mismatch vs f32 reference"

    print("KERNEL_OK")
</pallas_src>

<mosaic_0001>
module attributes {stable_mosaic.version = 11 : i64} {
  func.func @gru_kernel(%arg0: memref<64x16xf32, #tpu.memory_space<vmem>>, %arg1: memref<8x128xf32, #tpu.memory_space<vmem>>, %arg2: memref<16x384xf32, #tpu.memory_space<vmem>>, %arg3: memref<128x384xbf16, #tpu.memory_space<vmem>>, %arg4: memref<1x384xf32, #tpu.memory_space<vmem>>, %arg5: memref<1x128xf32, #tpu.memory_space<vmem>>, %arg6: memref<128x8xf32, #tpu.memory_space<vmem>>, %arg7: memref<1x8xf32, #tpu.memory_space<vmem>>, %arg8: memref<8x8xf32, #tpu.memory_space<vmem>>, %arg9: memref<8x128xf32, #tpu.memory_space<vmem>>) attributes {dimension_semantics = [], scalar_prefetch = 0 : i64, scratch_operands = 0 : i64, tpu.core_type = #tpu.core_type<tc>} {
    %c0 = arith.constant 0 : index
    %c0_0 = arith.constant 0 : index
    %0 = vector.load %arg0[%c0, %c0_0] : memref<64x16xf32, #tpu.memory_space<vmem>>, vector<64x16xf32>
    %c0_1 = arith.constant 0 : index
    %c0_2 = arith.constant 0 : index
    %1 = vector.load %arg2[%c0_1, %c0_2] : memref<16x384xf32, #tpu.memory_space<vmem>>, vector<16x384xf32>
    %cst = arith.constant dense<0.000000e+00> : vector<64x384xf32>
    %2 = tpu.matmul %0, %1, %cst {dimension_numbers = #tpu.dot_dimension_numbers<[1], [0], [0], [1], [0, 0, 1, 1], [], []>} : vector<64x16xf32>, vector<16x384xf32>, vector<64x384xf32> -> vector<64x384xf32>
    %c0_3 = arith.constant 0 : index
    %c0_4 = arith.constant 0 : index
    %3 = vector.load %arg4[%c0_3, %c0_4] : memref<1x384xf32, #tpu.memory_space<vmem>>, vector<1x384xf32>
    %4 = vector.broadcast %3 : vector<1x384xf32> to vector<64x384xf32>
    %5 = arith.addf %2, %4 : vector<64x384xf32>
    %c0_5 = arith.constant 0 : index
    %c0_6 = arith.constant 0 : index
    %6 = vector.load %arg3[%c0_5, %c0_6] : memref<128x384xbf16, #tpu.memory_space<vmem>>, vector<128x384xbf16>
    %c0_7 = arith.constant 0 : index
    %c0_8 = arith.constant 0 : index
    %7 = vector.load %arg5[%c0_7, %c0_8] : memref<1x128xf32, #tpu.memory_space<vmem>>, vector<1x128xf32>
    %8 = vector.shape_cast %7 : vector<1x128xf32> to vector<1x128xf32>
    %9 = vector.broadcast %8 : vector<1x128xf32> to vector<8x128xf32>
    %c0_9 = arith.constant 0 : index
    %c0_10 = arith.constant 0 : index
    %10 = vector.load %arg1[%c0_9, %c0_10] : memref<8x128xf32, #tpu.memory_space<vmem>>, vector<8x128xf32>
    %11 = vector.extract_strided_slice %5 {offsets = [0, 0], sizes = [8, 384], strides = [1, 1]} : vector<64x384xf32> to vector<8x384xf32>
    %12 = arith.truncf %10 : vector<8x128xf32> to vector<8x128xbf16>
    %cst_11 = arith.constant dense<0.000000e+00> : vector<8x384xf32>
    %13 = tpu.matmul %12, %6, %cst_11 {dimension_numbers = #tpu.dot_dimension_numbers<[1], [0], [0], [1], [0, 0, 1, 1], [], []>} : vector<8x128xbf16>, vector<128x384xbf16>, vector<8x384xf32> -> vector<8x384xf32>
    %14 = vector.extract_strided_slice %11 {offsets = [0, 0], sizes = [8, 128], strides = [1, 1]} : vector<8x384xf32> to vector<8x128xf32>
    %15 = vector.extract_strided_slice %13 {offsets = [0, 0], sizes = [8, 128], strides = [1, 1]} : vector<8x384xf32> to vector<8x128xf32>
    %16 = arith.addf %14, %15 : vector<8x128xf32>
    %cst_12 = arith.constant 5.000000e-01 : f32
    %17 = vector.broadcast %cst_12 : f32 to vector<8x128xf32>
    %18 = arith.mulf %17, %16 : vector<8x128xf32>
    %19 = math.tanh %18 : vector<8x128xf32>
    %cst_13 = arith.constant 1.000000e+00 : f32
    %20 = vector.broadcast %cst_13 : f32 to vector<8x128xf32>
    %21 = arith.addf %19, %20 : vector<8x128xf32>
    %cst_14 = arith.constant 5.000000e-01 : f32
    %22 = vector.broadcast %cst_14 : f32 to vector<8x128xf32>
    %23 = arith.mulf %22, %21 : vector<8x128xf32>
    %24 = vector.extract_strided_slice %11 {offsets = [0, 128], sizes = [8, 128], strides = [1, 1]} : vector<8x384xf32> to vector<8x128xf32>
    %25 = vector.extract_strided_slice %13 {offsets = [0, 128], sizes = [8, 128], strides = [1, 1]} : vector<8x384xf32> to vector<8x128xf32>
    %26 = arith.addf %24, %25 : vector<8x128xf32>
    %cst_15 = arith.constant 5.000000e-01 : f32
    %27 = vector.broadcast %cst_15 : f32 to vector<8x128xf32>
    %28 = arith.mulf %27, %26 : vector<8x128xf32>
    %29 = math.tanh %28 : vector<8x128xf32>
    %cst_16 = arith.constant 1.000000e+00 : f32
    %30 = vector.broadcast %cst_16 : f32 to vector<8x128xf32>
    %31 = arith.addf %29, %30 : vector<8x128xf32>
    %cst_17 = arith.constant 5.000000e-01 : f32
    %32 = vector.broadcast %cst_17 : f32 to vector<8x128xf32>
    %33 = arith.mulf %32, %31 : vector<8x128xf32>
    %34 = vector.extract_strided_slice %11 {offsets = [0, 256], sizes = [8, 128], strides = [1, 1]} : vector<8x384xf32> to vector<8x128xf32>
    %35 = vector.extract_strided_slice %13 {offsets = [0, 256], sizes = [8, 128], strides = [1, 1]} : vector<8x384xf32> to vector<8x128xf32>
    %36 = arith.addf %35, %9 : vector<8x128xf32>
    %37 = arith.mulf %23, %36 : vector<8x128xf32>
    %38 = arith.addf %34, %37 : vector<8x128xf32>
    %39 = math.tanh %38 : vector<8x128xf32>
    %cst_18 = arith.constant 1.000000e+00 : f32
    %40 = vector.broadcast %cst_18 : f32 to vector<8x128xf32>
    %41 = arith.subf %40, %33 : vector<8x128xf32>
    %42 = arith.mulf %41, %39 : vector<8x128xf32>
    %43 = arith.mulf %33, %10 : vector<8x128xf32>
    %44 = arith.addf %42, %43 : vector<8x128xf32>
    %45 = vector.extract_strided_slice %5 {offsets = [8, 0], sizes = [8, 384], strides = [1, 1]} : vector<64x384xf32> to vector<8x384xf32>
    %46 = arith.truncf %44 : vector<8x128xf32> to vector<8x128xbf16>
    %cst_19 = arith.constant dense<0.000000e+00> : vector<8x384xf32>
    %47 = tpu.matmul %46, %6, %cst_19 {dimension_numbers = #tpu.dot_dimension_numbers<[1], [0], [0], [1], [0, 0, 1, 1], [], []>} : vector<8x128xbf16>, vector<128x384xbf16>, vector<8x384xf32> -> vector<8x384xf32>
    %48 = vector.extract_strided_slice %45 {offsets = [0, 0], sizes = [8, 128], strides = [1, 1]} : vector<8x384xf32> to vector<8x128xf32>
    %49 = vector.extract_strided_slice %47 {offsets = [0, 0], sizes = [8, 128], strides = [1, 1]} : vector<8x384xf32> to vector<8x128xf32>
    %50 = arith.addf %48, %49 : vector<8x128xf32>
    %cst_20 = arith.constant 5.000000e-01 : f32
    %51 = vector.broadcast %cst_20 : f32 to vector<8x128xf32>
    %52 = arith.mulf %51, %50 : vector<8x128xf32>
    %53 = math.tanh %52 : vector<8x128xf32>
    %cst_21 = arith.constant 1.000000e+00 : f32
    %54 = vector.broadcast %cst_21 : f32 to vector<8x128xf32>
    %55 = arith.addf %53, %54 : vector<8x128xf32>
    %cst_22 = arith.constant 5.000000e-01 : f32
    %56 = vector.broadcast %cst_22 : f32 to vector<8x128xf32>
    %57 = arith.mulf %56, %55 : vector<8x128xf32>
    %58 = vector.extract_strided_slice %45 {offsets = [0, 128], sizes = [8, 128], strides = [1, 1]} : vector<8x384xf32> to vector<8x128xf32>
    %59 = vector.extract_strided_slice %47 {offsets = [0, 128], sizes = [8, 128], strides = [1, 1]} : vector<8x384xf32> to vector<8x128xf32>
    %60 = arith.addf %58, %59 : vector<8x128xf32>
    %cst_23 = arith.constant 5.000000e-01 : f32
    %61 = vector.broadcast %cst_23 : f32 to vector<8x128xf32>
    %62 = arith.mulf %61, %60 : vector<8x128xf32>
    %63 = math.tanh %62 : vector<8x128xf32>
    %cst_24 = arith.constant 1.000000e+00 : f32
    %64 = vector.broadcast %cst_24 : f32 to vector<8x128xf32>
    %65 = arith.addf %63, %64 : vector<8x128xf32>
    %cst_25 = arith.constant 5.000000e-01 : f32
    %66 = vector.broadcast %cst_25 : f32 to vector<8x128xf32>
    %67 = arith.mulf %66, %65 : vector<8x128xf32>
    %68 = vector.extract_strided_slice %45 {offsets = [0, 256], sizes = [8, 128], strides = [1, 1]} : vector<8x384xf32> to vector<8x128xf32>
    %69 = vector.extract_strided_slice %47 {offsets = [0, 256], sizes = [8, 128], strides = [1, 1]} : vector<8x384xf32> to vector<8x128xf32>
    %70 = arith.addf %69, %9 : vector<8x128xf32>
    %71 = arith.mulf %57, %70 : vector<8x128xf32>
    %72 = arith.addf %68, %71 : vector<8x128xf32>
    %73 = math.tanh %72 : vector<8x128xf32>
    %cst_26 = arith.constant 1.000000e+00 : f32
    %74 = vector.broadcast %cst_26 : f32 to vector<8x128xf32>
    %75 = arith.subf %74, %67 : vector<8x128xf32>
    %76 = arith.mulf %75, %73 : vector<8x128xf32>
    %77 = arith.mulf %67, %44 : vector<8x128xf32>
    %78 = arith.addf %76, %77 : vector<8x128xf32>
    %79 = vector.extract_strided_slice %5 {offsets = [16, 0], sizes = [8, 384], strides = [1, 1]} : vector<64x384xf32> to vector<8x384xf32>
    %80 = arith.truncf %78 : vector<8x128xf32> to vector<8x128xbf16>
    %cst_27 = arith.constant dense<0.000000e+00> : vector<8x384xf32>
    %81 = tpu.matmul %80, %6, %cst_27 {dimension_numbers = #tpu.dot_dimension_numbers<[1], [0], [0], [1], [0, 0, 1, 1], [], []>} : vector<8x128xbf16>, vector<128x384xbf16>, vector<8x384xf32> -> vector<8x384xf32>
    %82 = vector.extract_strided_slice %79 {offsets = [0, 0], sizes = [8, 128], strides = [1, 1]} : vector<8x384xf32> to vector<8x128xf32>
    %83 = vector.extract_strided_slice %81 {offsets = [0, 0], sizes = [8, 128], strides = [1, 1]} : vector<8x384xf32> to vector<8x128xf32>
    %84 = arith.addf %82, %83 : vector<8x128xf32>
    %cst_28 = arith.constant 5.000000e-01 : f32
    %85 = vector.broadcast %cst_28 : f32 to vector<8x128xf32>
    %86 = arith.mulf %85, %84 : vector<8x128xf32>
    %87 = math.tanh %86 : vector<8x128xf32>
    %cst_29 = arith.constant 1.000000e+00 : f32
    %88 = vector.broadcast %cst_29 : f32 to vector<8x128xf32>
    %89 = arith.addf %87, %88 : vector<8x128xf32>
    %cst_30 = arith.constant 5.000000e-01 : f32
    %90 = vector.broadcast %cst_30 : f32 to vector<8x128xf32>
    %91 = arith.mulf %90, %89 : vector<8x128xf32>
    %92 = vector.extract_strided_slice %79 {offsets = [0, 128], sizes = [8, 128], strides = [1, 1]} : vector<8x384xf32> to vector<8x128xf32>
    %93 = vector.extract_strided_slice %81 {offsets = [0, 128], sizes = [8, 128], strides = [1, 1]} : vector<8x384xf32> to vector<8x128xf32>
    %94 = arith.addf %92, %93 : vector<8x128xf32>
    %cst_31 = arith.constant 5.000000e-01 : f32
    %95 = vector.broadcast %cst_31 : f32 to vector<8x128xf32>
    %96 = arith.mulf %95, %94 : vector<8x128xf32>
    %97 = math.tanh %96 : vector<8x128xf32>
    %cst_32 = arith.constant 1.000000e+00 : f32
    %98 = vector.broadcast %cst_32 : f32 to vector<8x128xf32>
    %99 = arith.addf %97, %98 : vector<8x128xf32>
    %cst_33 = arith.constant 5.000000e-01 : f32
    %100 = vector.broadcast %cst_33 : f32 to vector<8x128xf32>
    %101 = arith.mulf %100, %99 : vector<8x128xf32>
    %102 = vector.extract_strided_slice %79 {offsets = [0, 256], sizes = [8, 128], strides = [1, 1]} : vector<8x384xf32> to vector<8x128xf32>
    %103 = vector.extract_strided_slice %81 {offsets = [0, 256], sizes = [8, 128], strides = [1, 1]} : vector<8x384xf32> to vector<8x128xf32>
    %104 = arith.addf %103, %9 : vector<8x128xf32>
    %105 = arith.mulf %91, %104 : vector<8x128xf32>
    %106 = arith.addf %102, %105 : vector<8x128xf32>
    %107 = math.tanh %106 : vector<8x128xf32>
    %cst_34 = arith.constant 1.000000e+00 : f32
    %108 = vector.broadcast %cst_34 : f32 to vector<8x128xf32>
    %109 = arith.subf %108, %101 : vector<8x128xf32>
    %110 = arith.mulf %109, %107 : vector<8x128xf32>
    %111 = arith.mulf %101, %78 : vector<8x128xf32>
    %112 = arith.addf %110, %111 : vector<8x128xf32>
    %113 = vector.extract_strided_slice %5 {offsets = [24, 0], sizes = [8, 384], strides = [1, 1]} : vector<64x384xf32> to vector<8x384xf32>
    %114 = arith.truncf %112 : vector<8x128xf32> to vector<8x128xbf16>
    %cst_35 = arith.constant dense<0.000000e+00> : vector<8x384xf32>
    %115 = tpu.matmul %114, %6, %cst_35 {dimension_numbers = #tpu.dot_dimension_numbers<[1], [0], [0], [1], [0, 0, 1, 1], [], []>} : vector<8x128xbf16>, vector<128x384xbf16>, vector<8x384xf32> -> vector<8x384xf32>
    %116 = vector.extract_strided_slice %113 {offsets = [0, 0], sizes = [8, 128], strides = [1, 1]} : vector<8x384xf32> to vector<8x128xf32>
    %117 = vector.extract_strided_slice %115 {offsets = [0, 0], sizes = [8, 128], strides = [1, 1]} : vector<8x384xf32> to vector<8x128xf32>
    %118 = arith.addf %116, %117 : vector<8x128xf32>
    %cst_36 = arith.constant 5.000000e-01 : f32
    %119 = vector.broadcast %cst_36 : f32 to vector<8x128xf32>
    %120 = arith.mulf %119, %118 : vector<8x128xf32>
    %121 = math.tanh %120 : vector<8x128xf32>
    %cst_37 = arith.constant 1.000000e+00 : f32
    %122 = vector.broadcast %cst_37 : f32 to vector<8x128xf32>
    %123 = arith.addf %121, %122 : vector<8x128xf32>
    %cst_38 = arith.constant 5.000000e-01 : f32
    %124 = vector.broadcast %cst_38 : f32 to vector<8x128xf32>
    %125 = arith.mulf %124, %123 : vector<8x128xf32>
    %126 = vector.extract_strided_slice %113 {offsets = [0, 128], sizes = [8, 128], strides = [1, 1]} : vector<8x384xf32> to vector<8x128xf32>
    %127 = vector.extract_strided_slice %115 {offsets = [0, 128], sizes = [8, 128], strides = [1, 1]} : vector<8x384xf32> to vector<8x128xf32>
    %128 = arith.addf %126, %127 : vector<8x128xf32>
    %cst_39 = arith.constant 5.000000e-01 : f32
    %129 = vector.broadcast %cst_39 : f32 to vector<8x128xf32>
    %130 = arith.mulf %129, %128 : vector<8x128xf32>
    %131 = math.tanh %130 : vector<8x128xf32>
    %cst_40 = arith.constant 1.000000e+00 : f32
    %132 = vector.broadcast %cst_40 : f32 to vector<8x128xf32>
    %133 = arith.addf %131, %132 : vector<8x128xf32>
    %cst_41 = arith.constant 5.000000e-01 : f32
    %134 = vector.broadcast %cst_41 : f32 to vector<8x128xf32>
    %135 = arith.mulf %134, %133 : vector<8x128xf32>
    %136 = vector.extract_strided_slice %113 {offsets = [0, 256], sizes = [8, 128], strides = [1, 1]} : vector<8x384xf32> to vector<8x128xf32>
    %137 = vector.extract_strided_slice %115 {offsets = [0, 256], sizes = [8, 128], strides = [1, 1]} : vector<8x384xf32> to vector<8x128xf32>
    %138 = arith.addf %137, %9 : vector<8x128xf32>
    %139 = arith.mulf %125, %138 : vector<8x128xf32>
    %140 = arith.addf %136, %139 : vector<8x128xf32>
    %141 = math.tanh %140 : vector<8x128xf32>
    %cst_42 = arith.constant 1.000000e+00 : f32
    %142 = vector.broadcast %cst_42 : f32 to vector<8x128xf32>
    %143 = arith.subf %142, %135 : vector<8x128xf32>
    %144 = arith.mulf %143, %141 : vector<8x128xf32>
    %145 = arith.mulf %135, %112 : vector<8x128xf32>
    %146 = arith.addf %144, %145 : vector<8x128xf32>
    %147 = vector.extract_strided_slice %5 {offsets = [32, 0], sizes = [8, 384], strides = [1, 1]} : vector<64x384xf32> to vector<8x384xf32>
    %148 = arith.truncf %146 : vector<8x128xf32> to vector<8x128xbf16>
    %cst_43 = arith.constant dense<0.000000e+00> : vector<8x384xf32>
    %149 = tpu.matmul %148, %6, %cst_43 {dimension_numbers = #tpu.dot_dimension_numbers<[1], [0], [0], [1], [0, 0, 1, 1], [], []>} : vector<8x128xbf16>, vector<128x384xbf16>, vector<8x384xf32> -> vector<8x384xf32>
    %150 = vector.extract_strided_slice %147 {offsets = [0, 0], sizes = [8, 128], strides = [1, 1]} : vector<8x384xf32> to vector<8x128xf32>
    %151 = vector.extract_strided_slice %149 {offsets = [0, 0], sizes = [8, 128], strides = [1, 1]} : vector<8x384xf32> to vector<8x128xf32>
    %152 = arith.addf %150, %151 : vector<8x128xf32>
    %cst_44 = arith.constant 5.000000e-01 : f32
    %153 = vector.broadcast %cst_44 : f32 to vector<8x128xf32>
    %154 = arith.mulf %153, %152 : vector<8x128xf32>
    %155 = math.tanh %154 : vector<8x128xf32>
    %cst_45 = arith.constant 1.000000e+00 : f32
    %156 = vector.broadcast %cst_45 : f32 to vector<8x128xf32>
    %157 = arith.addf %155, %156 : vector<8x128xf32>
    %cst_46 = arith.constant 5.000000e-01 : f32
    %158 = vector.broadcast %cst_46 : f32 to vector<8x128xf32>
    %159 = arith.mulf %158, %157 : vector<8x128xf32>
    %160 = vector.extract_strided_slice %147 {offsets = [0, 128], sizes = [8, 128], strides = [1, 1]} : vector<8x384xf32> to vector<8x128xf32>
    %161 = vector.extract_strided_slice %149 {offsets = [0, 128], sizes = [8, 128], strides = [1, 1]} : vector<8x384xf32> to vector<8x128xf32>
    %162 = arith.addf %160, %161 : vector<8x128xf32>
    %cst_47 = arith.constant 5.000000e-01 : f32
    %163 = vector.broadcast %cst_47 : f32 to vector<8x128xf32>
    %164 = arith.mulf %163, %162 : vector<8x128xf32>
    %165 = math.tanh %164 : vector<8x128xf32>
    %cst_48 = arith.constant 1.000000e+00 : f32
    %166 = vector.broadcast %cst_48 : f32 to vector<8x128xf32>
    %167 = arith.addf %165, %166 : vector<8x128xf32>
    %cst_49 = arith.constant 5.000000e-01 : f32
    %168 = vector.broadcast %cst_49 : f32 to vector<8x128xf32>
    %169 = arith.mulf %168, %167 : vector<8x128xf32>
    %170 = vector.extract_strided_slice %147 {offsets = [0, 256], sizes = [8, 128], strides = [1, 1]} : vector<8x384xf32> to vector<8x128xf32>
    %171 = vector.extract_strided_slice %149 {offsets = [0, 256], sizes = [8, 128], strides = [1, 1]} : vector<8x384xf32> to vector<8x128xf32>
    %172 = arith.addf %171, %9 : vector<8x128xf32>
    %173 = arith.mulf %159, %172 : vector<8x128xf32>
    %174 = arith.addf %170, %173 : vector<8x128xf32>
    %175 = math.tanh %174 : vector<8x128xf32>
    %cst_50 = arith.constant 1.000000e+00 : f32
    %176 = vector.broadcast %cst_50 : f32 to vector<8x128xf32>
    %177 = arith.subf %176, %169 : vector<8x128xf32>
    %178 = arith.mulf %177, %175 : vector<8x128xf32>
    %179 = arith.mulf %169, %146 : vector<8x128xf32>
    %180 = arith.addf %178, %179 : vector<8x128xf32>
    %181 = vector.extract_strided_slice %5 {offsets = [40, 0], sizes = [8, 384], strides = [1, 1]} : vector<64x384xf32> to vector<8x384xf32>
    %182 = arith.truncf %180 : vector<8x128xf32> to vector<8x128xbf16>
    %cst_51 = arith.constant dense<0.000000e+00> : vector<8x384xf32>
    %183 = tpu.matmul %182, %6, %cst_51 {dimension_numbers = #tpu.dot_dimension_numbers<[1], [0], [0], [1], [0, 0, 1, 1], [], []>} : vector<8x128xbf16>, vector<128x384xbf16>, vector<8x384xf32> -> vector<8x384xf32>
    %184 = vector.extract_strided_slice %181 {offsets = [0, 0], sizes = [8, 128], strides = [1, 1]} : vector<8x384xf32> to vector<8x128xf32>
    %185 = vector.extract_strided_slice %183 {offsets = [0, 0], sizes = [8, 128], strides = [1, 1]} : vector<8x384xf32> to vector<8x128xf32>
    %186 = arith.addf %184, %185 : vector<8x128xf32>
    %cst_52 = arith.constant 5.000000e-01 : f32
    %187 = vector.broadcast %cst_52 : f32 to vector<8x128xf32>
    %188 = arith.mulf %187, %186 : vector<8x128xf32>
    %189 = math.tanh %188 : vector<8x128xf32>
    %cst_53 = arith.constant 1.000000e+00 : f32
    %190 = vector.broadcast %cst_53 : f32 to vector<8x128xf32>
    %191 = arith.addf %189, %190 : vector<8x128xf32>
    %cst_54 = arith.constant 5.000000e-01 : f32
    %192 = vector.broadcast %cst_54 : f32 to vector<8x128xf32>
    %193 = arith.mulf %192, %191 : vector<8x128xf32>
    %194 = vector.extract_strided_slice %181 {offsets = [0, 128], sizes = [8, 128], strides = [1, 1]} : vector<8x384xf32> to vector<8x128xf32>
    %195 = vector.extract_strided_slice %183 {offsets = [0, 128], sizes = [8, 128], strides = [1, 1]} : vector<8x384xf32> to vector<8x128xf32>
    %196 = arith.addf %194, %195 : vector<8x128xf32>
    %cst_55 = arith.constant 5.000000e-01 : f32
    %197 = vector.broadcast %cst_55 : f32 to vector<8x128xf32>
    %198 = arith.mulf %197, %196 : vector<8x128xf32>
    %199 = math.tanh %198 : vector<8x128xf32>
    %cst_56 = arith.constant 1.000000e+00 : f32
    %200 = vector.broadcast %cst_56 : f32 to vector<8x128xf32>
    %201 = arith.addf %199, %200 : vector<8x128xf32>
    %cst_57 = arith.constant 5.000000e-01 : f32
    %202 = vector.broadcast %cst_57 : f32 to vector<8x128xf32>
    %203 = arith.mulf %202, %201 : vector<8x128xf32>
    %204 = vector.extract_strided_slice %181 {offsets = [0, 256], sizes = [8, 128], strides = [1, 1]} : vector<8x384xf32> to vector<8x128xf32>
    %205 = vector.extract_strided_slice %183 {offsets = [0, 256], sizes = [8, 128], strides = [1, 1]} : vector<8x384xf32> to vector<8x128xf32>
    %206 = arith.addf %205, %9 : vector<8x128xf32>
    %207 = arith.mulf %193, %206 : vector<8x128xf32>
    %208 = arith.addf %204, %207 : vector<8x128xf32>
    %209 = math.tanh %208 : vector<8x128xf32>
    %cst_58 = arith.constant 1.000000e+00 : f32
    %210 = vector.broadcast %cst_58 : f32 to vector<8x128xf32>
    %211 = arith.subf %210, %203 : vector<8x128xf32>
    %212 = arith.mulf %211, %209 : vector<8x128xf32>
    %213 = arith.mulf %203, %180 : vector<8x128xf32>
    %214 = arith.addf %212, %213 : vector<8x128xf32>
    %215 = vector.extract_strided_slice %5 {offsets = [48, 0], sizes = [8, 384], strides = [1, 1]} : vector<64x384xf32> to vector<8x384xf32>
    %216 = arith.truncf %214 : vector<8x128xf32> to vector<8x128xbf16>
    %cst_59 = arith.constant dense<0.000000e+00> : vector<8x384xf32>
    %217 = tpu.matmul %216, %6, %cst_59 {dimension_numbers = #tpu.dot_dimension_numbers<[1], [0], [0], [1], [0, 0, 1, 1], [], []>} : vector<8x128xbf16>, vector<128x384xbf16>, vector<8x384xf32> -> vector<8x384xf32>
    %218 = vector.extract_strided_slice %215 {offsets = [0, 0], sizes = [8, 128], strides = [1, 1]} : vector<8x384xf32> to vector<8x128xf32>
    %219 = vector.extract_strided_slice %217 {offsets = [0, 0], sizes = [8, 128], strides = [1, 1]} : vector<8x384xf32> to vector<8x128xf32>
    %220 = arith.addf %218, %219 : vector<8x128xf32>
    %cst_60 = arith.constant 5.000000e-01 : f32
    %221 = vector.broadcast %cst_60 : f32 to vector<8x128xf32>
    %222 = arith.mulf %221, %220 : vector<8x128xf32>
    %223 = math.tanh %222 : vector<8x128xf32>
    %cst_61 = arith.constant 1.000000e+00 : f32
    %224 = vector.broadcast %cst_61 : f32 to vector<8x128xf32>
    %225 = arith.addf %223, %224 : vector<8x128xf32>
    %cst_62 = arith.constant 5.000000e-01 : f32
    %226 = vector.broadcast %cst_62 : f32 to vector<8x128xf32>
    %227 = arith.mulf %226, %225 : vector<8x128xf32>
    %228 = vector.extract_strided_slice %215 {offsets = [0, 128], sizes = [8, 128], strides = [1, 1]} : vector<8x384xf32> to vector<8x128xf32>
    %229 = vector.extract_strided_slice %217 {offsets = [0, 128], sizes = [8, 128], strides = [1, 1]} : vector<8x384xf32> to vector<8x128xf32>
    %230 = arith.addf %228, %229 : vector<8x128xf32>
    %cst_63 = arith.constant 5.000000e-01 : f32
    %231 = vector.broadcast %cst_63 : f32 to vector<8x128xf32>
    %232 = arith.mulf %231, %230 : vector<8x128xf32>
    %233 = math.tanh %232 : vector<8x128xf32>
    %cst_64 = arith.constant 1.000000e+00 : f32
    %234 = vector.broadcast %cst_64 : f32 to vector<8x128xf32>
    %235 = arith.addf %233, %234 : vector<8x128xf32>
    %cst_65 = arith.constant 5.000000e-01 : f32
    %236 = vector.broadcast %cst_65 : f32 to vector<8x128xf32>
    %237 = arith.mulf %236, %235 : vector<8x128xf32>
    %238 = vector.extract_strided_slice %215 {offsets = [0, 256], sizes = [8, 128], strides = [1, 1]} : vector<8x384xf32> to vector<8x128xf32>
    %239 = vector.extract_strided_slice %217 {offsets = [0, 256], sizes = [8, 128], strides = [1, 1]} : vector<8x384xf32> to vector<8x128xf32>
    %240 = arith.addf %239, %9 : vector<8x128xf32>
    %241 = arith.mulf %227, %240 : vector<8x128xf32>
    %242 = arith.addf %238, %241 : vector<8x128xf32>
    %243 = math.tanh %242 : vector<8x128xf32>
    %cst_66 = arith.constant 1.000000e+00 : f32
    %244 = vector.broadcast %cst_66 : f32 to vector<8x128xf32>
    %245 = arith.subf %244, %237 : vector<8x128xf32>
    %246 = arith.mulf %245, %243 : vector<8x128xf32>
    %247 = arith.mulf %237, %214 : vector<8x128xf32>
    %248 = arith.addf %246, %247 : vector<8x128xf32>
    %249 = vector.extract_strided_slice %5 {offsets = [56, 0], sizes = [8, 384], strides = [1, 1]} : vector<64x384xf32> to vector<8x384xf32>
    %250 = arith.truncf %248 : vector<8x128xf32> to vector<8x128xbf16>
    %cst_67 = arith.constant dense<0.000000e+00> : vector<8x384xf32>
    %251 = tpu.matmul %250, %6, %cst_67 {dimension_numbers = #tpu.dot_dimension_numbers<[1], [0], [0], [1], [0, 0, 1, 1], [], []>} : vector<8x128xbf16>, vector<128x384xbf16>, vector<8x384xf32> -> vector<8x384xf32>
    %252 = vector.extract_strided_slice %249 {offsets = [0, 0], sizes = [8, 128], strides = [1, 1]} : vector<8x384xf32> to vector<8x128xf32>
    %253 = vector.extract_strided_slice %251 {offsets = [0, 0], sizes = [8, 128], strides = [1, 1]} : vector<8x384xf32> to vector<8x128xf32>
    %254 = arith.addf %252, %253 : vector<8x128xf32>
    %cst_68 = arith.constant 5.000000e-01 : f32
    %255 = vector.broadcast %cst_68 : f32 to vector<8x128xf32>
    %256 = arith.mulf %255, %254 : vector<8x128xf32>
    %257 = math.tanh %256 : vector<8x128xf32>
    %cst_69 = arith.constant 1.000000e+00 : f32
    %258 = vector.broadcast %cst_69 : f32 to vector<8x128xf32>
    %259 = arith.addf %257, %258 : vector<8x128xf32>
    %cst_70 = arith.constant 5.000000e-01 : f32
    %260 = vector.broadcast %cst_70 : f32 to vector<8x128xf32>
    %261 = arith.mulf %260, %259 : vector<8x128xf32>
    %262 = vector.extract_strided_slice %249 {offsets = [0, 128], sizes = [8, 128], strides = [1, 1]} : vector<8x384xf32> to vector<8x128xf32>
    %263 = vector.extract_strided_slice %251 {offsets = [0, 128], sizes = [8, 128], strides = [1, 1]} : vector<8x384xf32> to vector<8x128xf32>
    %264 = arith.addf %262, %263 : vector<8x128xf32>
    %cst_71 = arith.constant 5.000000e-01 : f32
    %265 = vector.broadcast %cst_71 : f32 to vector<8x128xf32>
    %266 = arith.mulf %265, %264 : vector<8x128xf32>
    %267 = math.tanh %266 : vector<8x128xf32>
    %cst_72 = arith.constant 1.000000e+00 : f32
    %268 = vector.broadcast %cst_72 : f32 to vector<8x128xf32>
    %269 = arith.addf %267, %268 : vector<8x128xf32>
    %cst_73 = arith.constant 5.000000e-01 : f32
    %270 = vector.broadcast %cst_73 : f32 to vector<8x128xf32>
    %271 = arith.mulf %270, %269 : vector<8x128xf32>
    %272 = vector.extract_strided_slice %249 {offsets = [0, 256], sizes = [8, 128], strides = [1, 1]} : vector<8x384xf32> to vector<8x128xf32>
    %273 = vector.extract_strided_slice %251 {offsets = [0, 256], sizes = [8, 128], strides = [1, 1]} : vector<8x384xf32> to vector<8x128xf32>
    %274 = arith.addf %273, %9 : vector<8x128xf32>
    %275 = arith.mulf %261, %274 : vector<8x128xf32>
    %276 = arith.addf %272, %275 : vector<8x128xf32>
    %277 = math.tanh %276 : vector<8x128xf32>
    %cst_74 = arith.constant 1.000000e+00 : f32
    %278 = vector.broadcast %cst_74 : f32 to vector<8x128xf32>
    %279 = arith.subf %278, %271 : vector<8x128xf32>
    %280 = arith.mulf %279, %277 : vector<8x128xf32>
    %281 = arith.mulf %271, %248 : vector<8x128xf32>
    %282 = arith.addf %280, %281 : vector<8x128xf32>
    %c0_75 = arith.constant 0 : index
    %c0_76 = arith.constant 0 : index
    %283 = vector.load %arg9[%c0_75, %c0_76] : memref<8x128xf32, #tpu.memory_space<vmem>>, vector<8x128xf32>
    tpu.vector_store %arg9[%c0_75, %c0_76], %282 {strides = array<i32>} : memref<8x128xf32, #tpu.memory_space<vmem>>, vector<8x128xf32>,
    %c0_77 = arith.constant 0 : index
    %c0_78 = arith.constant 0 : index
    %284 = vector.load %arg6[%c0_77, %c0_78] : memref<128x8xf32, #tpu.memory_space<vmem>>, vector<128x8xf32>
    %cst_79 = arith.constant dense<0.000000e+00> : vector<8x8xf32>
    %285 = tpu.matmul %282, %284, %cst_79 {dimension_numbers = #tpu.dot_dimension_numbers<[1], [0], [0], [1], [0, 0, 1, 1], [], []>} : vector<8x128xf32>, vector<128x8xf32>, vector<8x8xf32> -> vector<8x8xf32>
    %c0_80 = arith.constant 0 : index
    %c0_81 = arith.constant 0 : index
    %286 = vector.load %arg7[%c0_80, %c0_81] : memref<1x8xf32, #tpu.memory_space<vmem>>, vector<1x8xf32>
    %287 = vector.broadcast %286 : vector<1x8xf32> to vector<8x8xf32>
    %288 = arith.addf %285, %287 : vector<8x8xf32>
    %cst_82 = arith.constant dense<0xFF800000> : vector<8xf32>
    %289 = vector.multi_reduction <maximumf>, %288, %cst_82 [1] : vector<8x8xf32> to vector<8xf32>
    %290 = vector.shape_cast %289 : vector<8xf32> to vector<8x1xf32>
    %291 = vector.broadcast %290 : vector<8x1xf32> to vector<8x8xf32>
    %292 = arith.subf %288, %291 : vector<8x8xf32>
    %293 = math.exp %292 : vector<8x8xf32>
    %cst_83 = arith.constant dense<0.000000e+00> : vector<8xf32>
    %294 = vector.multi_reduction <add>, %293, %cst_83 [1] : vector<8x8xf32> to vector<8xf32>
    %295 = vector.shape_cast %294 : vector<8xf32> to vector<8x1xf32>
    %296 = math.log %295 : vector<8x1xf32>
    %297 = arith.addf %290, %296 : vector<8x1xf32>
    %298 = vector.broadcast %297 : vector<8x1xf32> to vector<8x8xf32>
    %299 = arith.subf %288, %298 : vector<8x8xf32>
    %c0_84 = arith.constant 0 : index
    %c0_85 = arith.constant 0 : index
    %300 = vector.load %arg8[%c0_84, %c0_85] : memref<8x8xf32, #tpu.memory_space<vmem>>, vector<8x8xf32>
    tpu.vector_store %arg8[%c0_84, %c0_85], %299 {strides = array<i32>} : memref<8x8xf32, #tpu.memory_space<vmem>>, vector<8x8xf32>,
    return
  }
}

</mosaic_0001>

<llo_original>
// kernel: gru_forward.1
$region0: #{gru_forward.1}
  #allocation0 [shape = 'u32[]', space=smem, size = 0x4, offset = 0x4, fixed_abs, tag = 'smem constant byte address 0x4 - core index']
  #allocation1 [shape = 'u32[144,128]{1,0:T(1,128)}', space=vmem, size = 0x12000, scoped, tag = 'internal scratch']
  %s0 = inlined_call_operand.vmem [shape: f32[64,16], index: 0, kind: input, shape index: {}]
  %s1 = inlined_call_operand.vmem [shape: f32[8,128], index: 1, kind: input, shape index: {}]
  %s2 = inlined_call_operand.vmem [shape: f32[16,384], index: 2, kind: input, shape index: {}]
  %s3 = inlined_call_operand.vmem [shape: bf16[128,384], index: 3, kind: input, shape index: {}]
  %s4 = inlined_call_operand.vmem [shape: f32[1,384], index: 4, kind: input, shape index: {}]
  %s5 = inlined_call_operand.vmem [shape: f32[1,128], index: 5, kind: input, shape index: {}]
  %s6 = inlined_call_operand.vmem [shape: f32[128,8], index: 6, kind: input, shape index: {}]
  %s7 = inlined_call_operand.vmem [shape: f32[1,8], index: 7, kind: input, shape index: {}]
  %s8 = inlined_call_operand.vmem [shape: f32[8,8], index: 8, kind: output, shape index: {0}]
  %s9 = inlined_call_operand.vmem [shape: f32[8,128], index: 9, kind: output, shape index: {1}]
  %10 = xla_tuple %s8, %s9
  %s11 = sld [smem:[#allocation0]]
  $region50: #{gru_forward.1} parent=0
    _
  %s13 = ssub.s32 1, %s11
  %s14 = scalar_select 0, %s13, %s11
  // Predicated region
  $region2: #{gru_forward.1} parent=0 // pred_check
    _
  $region3: #{gru_forward.1} parent=0 // pred_check_branch
    %16 = sbr.rel (0) target = $region5
  $region4: #{gru_forward.1} parent=0 // pred_region
    _
  $region5: #{gru_forward.1} parent=0 // pred_fallthru
    _
  // Predicated region
  $region6: #{gru_forward.1} parent=0 // pred_check
    _
  $region7: #{gru_forward.1} parent=0 // pred_check_branch
    %18 = sbr.rel (0) target = $region9
  $region8: #{gru_forward.1} parent=0 // pred_region
    _
  $region9: #{gru_forward.1} parent=0 // pred_fallthru
    _
  // Predicated region
  $region10: #{gru_forward.1} parent=0 // pred_check
    _
  $region11: #{gru_forward.1} parent=0 // pred_check_branch
    %20 = sbr.rel (0) target = $region13
  $region12: #{gru_forward.1} parent=0 // pred_region
    _
  $region13: #{gru_forward.1} parent=0 // pred_fallthru
    _
  // Predicated region
  $region14: #{gru_forward.1} parent=0 // pred_check
    _
  $region15: #{gru_forward.1} parent=0 // pred_check_branch
    %22 = sbr.rel (0) target = $region17
  $region16: #{gru_forward.1} parent=0 // pred_region
    _
  $region17: #{gru_forward.1} parent=0 // pred_fallthru
    _
  // Predicated region
  $region18: #{gru_forward.1} parent=0 // pred_check
    _
  $region19: #{gru_forward.1} parent=0 // pred_check_branch
    %24 = sbr.rel (0) target = $region21
  $region20: #{gru_forward.1} parent=0 // pred_region
    _
  $region21: #{gru_forward.1} parent=0 // pred_fallthru
    _
  // Predicated region
  $region22: #{gru_forward.1} parent=0 // pred_check
    _
  $region23: #{gru_forward.1} parent=0 // pred_check_branch
    %26 = sbr.rel (0) target = $region25
  $region24: #{gru_forward.1} parent=0 // pred_region
    _
  $region25: #{gru_forward.1} parent=0 // pred_fallthru
    _
  // Predicated region
  $region26: #{gru_forward.1} parent=0 // pred_check
    _
  $region27: #{gru_forward.1} parent=0 // pred_check_branch
    %28 = sbr.rel (0) target = $region29
  $region28: #{gru_forward.1} parent=0 // pred_region
    _
  $region29: #{gru_forward.1} parent=0 // pred_fallthru
    _
  // Predicated region
  $region30: #{gru_forward.1} parent=0 // pred_check
    _
  $region31: #{gru_forward.1} parent=0 // pred_check_branch
    %30 = sbr.rel (0) target = $region33
  $region32: #{gru_forward.1} parent=0 // pred_region
    _
  $region33: #{gru_forward.1} parent=0 // pred_fallthru
    _
  %v32 = vld [vmem:[%s0] sm:$0xff]
  %v33 = vld [vmem:[%s0 + $0x8] sm:$0xff]
  %v34 = vld [vmem:[%s0 + $0x10] sm:$0xff]
  %v35 = vld [vmem:[%s0 + $0x18] sm:$0xff]
  %v36 = vld [vmem:[%s0 + $0x20] sm:$0xff]
  %v37 = vld [vmem:[%s0 + $0x28] sm:$0xff]
  %v38 = vld [vmem:[%s0 + $0x30] sm:$0xff]
  %v39 = vld [vmem:[%s0 + $0x38] sm:$0xff]
  %v40 = vld [vmem:[%s2] sm:$0xff]
  %v41 = vld [vmem:[%s2 + $0x8] sm:$0xff]
  %v42 = vld [vmem:[%s2 + $0x10] sm:$0xff]
  %v43 = vld [vmem:[%s2 + $0x18] sm:$0xff]
  %v44 = vld [vmem:[%s2 + $0x20] sm:$0xff]
  %v45 = vld [vmem:[%s2 + $0x28] sm:$0xff]
  %v46 = vld [vmem:[%s4] sm:$0x7]
  %v48 = vlaneseq
  %v49 = vshrl.u32 %v48, 7
  %v50 = vsub.s32 0, %v49
  %v51 = vrot.slane %v46, %v50
  %v52 = vlaneseq
  %v53 = vshrl.u32 %v52, 7
  %v54 = vsub.s32 1, %v53
  %v55 = vrot.slane %v46, %v54
  %v56 = vlaneseq
  %v57 = vshrl.u32 %v56, 7
  %v58 = vsub.s32 2, %v57
  %v59 = vrot.slane %v46, %v58
  %vm63 = vcmask 130048
  %v65 = vsel %vm63, %v32, 0
  %v68 = vsel %vm63, %v33, 0
  %v71 = vsel %vm63, %v34, 0
  %v74 = vsel %vm63, %v35, 0
  %v77 = vsel %vm63, %v36, 0
  %v80 = vsel %vm63, %v37, 0
  %v83 = vsel %vm63, %v38, 0
  %v86 = vsel %vm63, %v39, 0
  %88 = vmatprep.subr.mxu0 %v41
  %89 = vmatpush1.msra.mxu0 %v40
  %90 = vmatprep.subr.mxu0 %v44
  %91 = vmatpush1.msra.mxu0 %v43
  %92 = vmatprep.subr.mxu0 0.0
  %93 = vmatpush1.msra.mxu0 0.0
  %94 = vmatprep.subr.mxu0 0.0
  %95 = vmatpush1.msra.mxu0 0.0
  %96 = vmatprep.subr.mxu0 0.0
  %97 = vmatpush1.msra.mxu0 0.0
  %98 = vmatprep.subr.mxu0 0.0
  %99 = vmatpush1.msra.mxu0 0.0
  %100 = vmatprep.subr.mxu0 0.0
  %101 = vmatpush1.msra.mxu0 0.0
  %102 = vmatprep.subr.mxu0 0.0
  %103 = vmatpush1.msra.mxu0 0.0
  %104 = vmatprep.subr.mxu0 0.0
  %105 = vmatpush1.msra.mxu0 0.0
  %106 = vmatprep.subr.mxu0 0.0
  %107 = vmatpush1.msra.mxu0 0.0
  %108 = vmatprep.subr.mxu0 0.0
  %109 = vmatpush1.msra.mxu0 0.0
  %110 = vmatprep.subr.mxu0 0.0
  %111 = vmatpush1.msra.mxu0 0.0
  %112 = vmatprep.subr.mxu0 0.0
  %113 = vmatpush1.msra.mxu0 0.0
  %114 = vmatprep.subr.mxu0 0.0
  %115 = vmatpush1.msra.mxu0 0.0
  %116 = vmatprep.subr.mxu0 0.0
  %117 = vmatpush1.msra.mxu0 0.0
  %118 = vmatprep.subr.mxu0 0.0
  %119 = vmatpush1.msra.mxu0 0.0
  %120 = vmatprep.subr.mxu0 0.0
  %121 = vmatpush1.msra.mxu0 0.0
  %122 = vmatprep.subr.mxu0 0.0
  %123 = vmatpush1.msra.mxu0 0.0
  %124 = vmatprep.subr.mxu0 0.0
  %125 = vmatpush1.msra.mxu0 0.0
  %126 = vmatprep.subr.mxu0 0.0
  %127 = vmatpush1.msra.mxu0 0.0
  %128 = vmatprep.subr.mxu0 0.0
  %129 = vmatpush1.msra.mxu0 0.0
  %130 = vmatprep.subr.mxu0 0.0
  %131 = vmatpush1.msra.mxu0 0.0
  %132 = vmatprep.subr.mxu0 0.0
  %133 = vmatpush1.msra.mxu0 0.0
  %134 = vmatprep.subr.mxu0 0.0
  %135 = vmatpush1.msra.mxu0 0.0
  %136 = vmatprep.subr.mxu0 0.0
  %137 = vmatpush1.msra.mxu0 0.0
  %138 = vmatprep.subr.mxu0 0.0
  %139 = vmatpush1.msra.mxu0 0.0
  %140 = vmatprep.subr.mxu0 0.0
  %141 = vmatpush1.msra.mxu0 0.0
  %142 = vmatprep.subr.mxu0 0.0
  %143 = vmatpush1.msra.mxu0 0.0
  %144 = vmatprep.subr.mxu0 0.0
  %145 = vmatpush1.msra.mxu0 0.0
  %146 = vmatprep.subr.mxu0 0.0
  %147 = vmatpush1.msra.mxu0 0.0
  %148 = vmatprep.subr.mxu0 0.0
  %149 = vmatpush1.msra.mxu0 0.0
  %150 = vmatprep.subr.mxu0 0.0
  %151 = vmatpush1.msra.mxu0 0.0
  %152 = vmatprep.mubr.f32.mxu0 0.0
  %153 = vmatmul.mubr.f32.gmra.mrb[0].mxu0 %v65
  %v154 = vpop.f32.mrb[0].mxu0
  %v155 = vadd.f32 %v51, %v154
  %v156 = vpop.f32.mrb[0].mxu0
  %v157 = vadd.f32 %v55, %v156
  %158 = vmatprep.mubr.f32.mxu0 0.0
  %159 = vmatmul.mubr.f32.gmra.mrb[0].mxu0 %v68
  %v160 = vpop.f32.mrb[0].mxu0
  %v161 = vadd.f32 %v51, %v160
  %v162 = vpop.f32.mrb[0].mxu0
  %v163 = vadd.f32 %v55, %v162
  %164 = vmatprep.mubr.f32.mxu0 0.0
  %165 = vmatmul.mubr.f32.gmra.mrb[0].mxu0 %v71
  %v166 = vpop.f32.mrb[0].mxu0
  %v167 = vadd.f32 %v51, %v166
  %v168 = vpop.f32.mrb[0].mxu0
  %v169 = vadd.f32 %v55, %v168
  %170 = vmatprep.mubr.f32.mxu0 0.0
  %171 = vmatmul.mubr.f32.gmra.mrb[0].mxu0 %v74
  %v172 = vpop.f32.mrb[0].mxu0
  %v173 = vadd.f32 %v51, %v172
  %v174 = vpop.f32.mrb[0].mxu0
  %v175 = vadd.f32 %v55, %v174
  %176 = vmatprep.mubr.f32.mxu0 0.0
  %177 = vmatmul.mubr.f32.gmra.mrb[0].mxu0 %v77
  %v178 = vpop.f32.mrb[0].mxu0
  %v179 = vadd.f32 %v51, %v178
  %v180 = vpop.f32.mrb[0].mxu0
  %v181 = vadd.f32 %v55, %v180
  %182 = vmatprep.mubr.f32.mxu0 0.0
  %183 = vmatmul.mubr.f32.gmra.mrb[0].mxu0 %v80
  %v184 = vpop.f32.mrb[0].mxu0
  %v185 = vadd.f32 %v51, %v184
  %v186 = vpop.f32.mrb[0].mxu0
  %v187 = vadd.f32 %v55, %v186
  %188 = vmatprep.mubr.f32.mxu0 0.0
  %189 = vmatmul.mubr.f32.gmra.mrb[0].mxu0 %v83
  %v190 = vpop.f32.mrb[0].mxu0
  %v191 = vadd.f32 %v51, %v190
  %v192 = vpop.f32.mrb[0].mxu0
  %v193 = vadd.f32 %v55, %v192
  %194 = vmatprep.mubr.f32.mxu0 0.0
  %195 = vmatmul.mubr.f32.gmra.mrb[0].mxu0 %v86
  %v196 = vpop.f32.mrb[0].mxu0
  %v197 = vadd.f32 %v51, %v196
  %v198 = vpop.f32.mrb[0].mxu0
  %v199 = vadd.f32 %v55, %v198
  %200 = vdwg.mxu0
  %201 = vmatprep.subr.mxu0 0.0
  %202 = vmatpush1.msra.mxu0 %v42
  %203 = vmatprep.subr.mxu0 0.0
  %204 = vmatpush1.msra.mxu0 %v45
  %205 = vmatprep.subr.mxu0 0.0
  %206 = vmatpush1.msra.mxu0 0.0
  %207 = vmatprep.subr.mxu0 0.0
  %208 = vmatpush1.msra.mxu0 0.0
  %209 = vmatprep.subr.mxu0 0.0
  %210 = vmatpush1.msra.mxu0 0.0
  %211 = vmatprep.subr.mxu0 0.0
  %212 = vmatpush1.msra.mxu0 0.0
  %213 = vmatprep.subr.mxu0 0.0
  %214 = vmatpush1.msra.mxu0 0.0
  %215 = vmatprep.subr.mxu0 0.0
  %216 = vmatpush1.msra.mxu0 0.0
  %217 = vmatprep.subr.mxu0 0.0
  %218 = vmatpush1.msra.mxu0 0.0
  %219 = vmatprep.subr.mxu0 0.0
  %220 = vmatpush1.msra.mxu0 0.0
  %221 = vmatprep.subr.mxu0 0.0
  %222 = vmatpush1.msra.mxu0 0.0
  %223 = vmatprep.subr.mxu0 0.0
  %224 = vmatpush1.msra.mxu0 0.0
  %225 = vmatprep.subr.mxu0 0.0
  %226 = vmatpush1.msra.mxu0 0.0
  %227 = vmatprep.subr.mxu0 0.0
  %228 = vmatpush1.msra.mxu0 0.0
  %229 = vmatprep.subr.mxu0 0.0
  %230 = vmatpush1.msra.mxu0 0.0
  %231 = vmatprep.subr.mxu0 0.0
  %232 = vmatpush1.msra.mxu0 0.0
  %233 = vmatprep.subr.mxu0 0.0
  %234 = vmatpush1.msra.mxu0 0.0
  %235 = vmatprep.subr.mxu0 0.0
  %236 = vmatpush1.msra.mxu0 0.0
  %237 = vmatprep.subr.mxu0 0.0
  %238 = vmatpush1.msra.mxu0 0.0
  %239 = vmatprep.subr.mxu0 0.0
  %240 = vmatpush1.msra.mxu0 0.0
  %241 = vmatprep.subr.mxu0 0.0
  %242 = vmatpush1.msra.mxu0 0.0
  %243 = vmatprep.subr.mxu0 0.0
  %244 = vmatpush1.msra.mxu0 0.0
  %245 = vmatprep.subr.mxu0 0.0
  %246 = vmatpush1.msra.mxu0 0.0
  %247 = vmatprep.subr.mxu0 0.0
  %248 = vmatpush1.msra.mxu0 0.0
  %249 = vmatprep.subr.mxu0 0.0
  %250 = vmatpush1.msra.mxu0 0.0
  %251 = vmatprep.subr.mxu0 0.0
  %252 = vmatpush1.msra.mxu0 0.0
  %253 = vmatprep.subr.mxu0 0.0
  %254 = vmatpush1.msra.mxu0 0.0
  %255 = vmatprep.subr.mxu0 0.0
  %256 = vmatpush1.msra.mxu0 0.0
  %257 = vmatprep.subr.mxu0 0.0
  %258 = vmatpush1.msra.mxu0 0.0
  %259 = vmatprep.subr.mxu0 0.0
  %260 = vmatpush1.msra.mxu0 0.0
  %261 = vmatprep.subr.mxu0 0.0
  %262 = vmatpush1.msra.mxu0 0.0
  %263 = vmatprep.subr.mxu0 0.0
  %264 = vmatpush1.msra.mxu0 0.0
  %265 = vmatprep.mubr.f32.mxu0 0.0
  %266 = vmatmul.mubr.f32.gmra.mrb[0].mxu0 %v65
  %v267 = vpop.f32.mrb[0].mxu0
  %v268 = vadd.f32 %v59, %v267
  %v269 = vpop.f32.mrb[0].mxu0
  %270 = vmatprep.mubr.f32.mxu0 0.0
  %271 = vmatmul.mubr.f32.gmra.mrb[0].mxu0 %v68
  %v272 = vpop.f32.mrb[0].mxu0
  %v273 = vadd.f32 %v59, %v272
  %v274 = vpop.f32.mrb[0].mxu0
  %275 = vmatprep.mubr.f32.mxu0 0.0
  %276 = vmatmul.mubr.f32.gmra.mrb[0].mxu0 %v71
  %v277 = vpop.f32.mrb[0].mxu0
  %v278 = vadd.f32 %v59, %v277
  %v279 = vpop.f32.mrb[0].mxu0
  %280 = vmatprep.mubr.f32.mxu0 0.0
  %281 = vmatmul.mubr.f32.gmra.mrb[0].mxu0 %v74
  %v282 = vpop.f32.mrb[0].mxu0
  %v283 = vadd.f32 %v59, %v282
  %v284 = vpop.f32.mrb[0].mxu0
  %285 = vmatprep.mubr.f32.mxu0 0.0
  %286 = vmatmul.mubr.f32.gmra.mrb[0].mxu0 %v77
  %v287 = vpop.f32.mrb[0].mxu0
  %v288 = vadd.f32 %v59, %v287
  %v289 = vpop.f32.mrb[0].mxu0
  %290 = vmatprep.mubr.f32.mxu0 0.0
  %291 = vmatmul.mubr.f32.gmra.mrb[0].mxu0 %v80
  %v292 = vpop.f32.mrb[0].mxu0
  %v293 = vadd.f32 %v59, %v292
  %v294 = vpop.f32.mrb[0].mxu0
  %295 = vmatprep.mubr.f32.mxu0 0.0
  %296 = vmatmul.mubr.f32.gmra.mrb[0].mxu0 %v83
  %v297 = vpop.f32.mrb[0].mxu0
  %v298 = vadd.f32 %v59, %v297
  %v299 = vpop.f32.mrb[0].mxu0
  %300 = vmatprep.mubr.f32.mxu0 0.0
  %301 = vmatmul.mubr.f32.gmra.mrb[0].mxu0 %v86
  %v302 = vpop.f32.mrb[0].mxu0
  %v303 = vadd.f32 %v59, %v302
  %v304 = vpop.f32.mrb[0].mxu0
  %305 = vdwg.mxu0
  %v306 = vld [vmem:[%s3] sm:$0xff]
  %v307 = vld [vmem:[%s3 + $0x8] sm:$0xf]
  %v308 = vld [vmem:[%s3 + $0xc] sm:$0xff]
  %v309 = vld [vmem:[%s3 + $0x14] sm:$0xf]
  %v310 = vld [vmem:[%s3 + $0x18] sm:$0xff]
  %v311 = vld [vmem:[%s3 + $0x20] sm:$0xf]
  %v312 = vld [vmem:[%s3 + $0x24] sm:$0xff]
  %v313 = vld [vmem:[%s3 + $0x2c] sm:$0xf]
  %v314 = vld [vmem:[%s3 + $0x30] sm:$0xff]
  %v315 = vld [vmem:[%s3 + $0x38] sm:$0xf]
  %v316 = vld [vmem:[%s3 + $0x3c] sm:$0xff]
  %v317 = vld [vmem:[%s3 + $0x44] sm:$0xf]
  %v318 = vld [vmem:[%s3 + $0x48] sm:$0xff]
  %v319 = vld [vmem:[%s3 + $0x50] sm:$0xf]
  %v320 = vld [vmem:[%s3 + $0x54] sm:$0xff]
  %v321 = vld [vmem:[%s3 + $0x5c] sm:$0xf]
  %v322 = vld [vmem:[%s3 + $0x60] sm:$0xff]
  %v323 = vld [vmem:[%s3 + $0x68] sm:$0xf]
  %v324 = vld [vmem:[%s3 + $0x6c] sm:$0xff]
  %v325 = vld [vmem:[%s3 + $0x74] sm:$0xf]
  %v326 = vld [vmem:[%s3 + $0x78] sm:$0xff]
  %v327 = vld [vmem:[%s3 + $0x80] sm:$0xf]
  %v328 = vld [vmem:[%s3 + $0x84] sm:$0xff]
  %v329 = vld [vmem:[%s3 + $0x8c] sm:$0xf]
  %v330 = vld [vmem:[%s3 + $0x90] sm:$0xff]
  %v331 = vld [vmem:[%s3 + $0x98] sm:$0xf]
  %v332 = vld [vmem:[%s3 + $0x9c] sm:$0xff]
  %v333 = vld [vmem:[%s3 + $0xa4] sm:$0xf]
  %v334 = vld [vmem:[%s3 + $0xa8] sm:$0xff]
  %v335 = vld [vmem:[%s3 + $0xb0] sm:$0xf]
  %v336 = vld [vmem:[%s3 + $0xb4] sm:$0xff]
  %v337 = vld [vmem:[%s3 + $0xbc] sm:$0xf]
  %v338 = vld [vmem:[%s5] sm:$0x1]
  %v340 = vlaneseq
  %v341 = vshrl.u32 %v340, 7
  %v342 = vsub.s32 0, %v341
  %v343 = vrot.slane %v338, %v342
  %v345 = vld [vmem:[%s1] sm:$0xff]
  %v346 = vpack.c.bf16 %v345, %v345
  %v379 = vunpack.c.l.b16 %v306
  %v380 = vunpack.c.h.b16 %v306
  %v381 = vunpack.c.l.b16 %v307
  %v382 = vunpack.c.l.b16 %v308
  %v383 = vunpack.c.h.b16 %v308
  %v384 = vunpack.c.l.b16 %v309
  %v385 = vunpack.c.l.b16 %v310
  %v386 = vunpack.c.h.b16 %v310
  %v387 = vunpack.c.l.b16 %v311
  %v388 = vunpack.c.l.b16 %v312
  %v389 = vunpack.c.h.b16 %v312
  %v390 = vunpack.c.l.b16 %v313
  %v391 = vunpack.c.l.b16 %v314
  %v392 = vunpack.c.h.b16 %v314
  %v393 = vunpack.c.l.b16 %v315
  %v394 = vunpack.c.l.b16 %v316
  %v395 = vunpack.c.h.b16 %v316
  %v396 = vunpack.c.l.b16 %v317
  %v397 = vunpack.c.l.b16 %v318
  %v398 = vunpack.c.h.b16 %v318
  %v399 = vunpack.c.l.b16 %v319
  %v400 = vunpack.c.l.b16 %v320
  %v401 = vunpack.c.h.b16 %v320
  %v402 = vunpack.c.l.b16 %v321
  %v403 = vunpack.c.l.b16 %v322
  %v404 = vunpack.c.h.b16 %v322
  %v405 = vunpack.c.l.b16 %v323
  %v406 = vunpack.c.l.b16 %v324
  %v407 = vunpack.c.h.b16 %v324
  %v408 = vunpack.c.l.b16 %v325
  %v409 = vunpack.c.l.b16 %v326
  %v410 = vunpack.c.h.b16 %v326
  %v411 = vunpack.c.l.b16 %v327
  %v412 = vunpack.c.l.b16 %v328
  %v413 = vunpack.c.h.b16 %v328
  %v414 = vunpack.c.l.b16 %v329
  %v415 = vunpack.c.l.b16 %v330
  %v416 = vunpack.c.h.b16 %v330
  %v417 = vunpack.c.l.b16 %v331
  %v418 = vunpack.c.l.b16 %v332
  %v419 = vunpack.c.h.b16 %v332
  %v420 = vunpack.c.l.b16 %v333
  %v421 = vunpack.c.l.b16 %v334
  %v422 = vunpack.c.h.b16 %v334
  %v423 = vunpack.c.l.b16 %v335
  %v424 = vunpack.c.l.b16 %v336
  %v425 = vunpack.c.h.b16 %v336
  %v426 = vunpack.c.l.b16 %v337
  %v427 = vpack.c.b16 %v382, %v379
  %v428 = vpack.c.b16 %v383, %v380
  %v429 = vpack.c.b16 %v384, %v381
  %v430 = vpack.c.b16 %v388, %v385
  %v431 = vpack.c.b16 %v389, %v386
  %v432 = vpack.c.b16 %v390, %v387
  %v433 = vpack.c.b16 %v394, %v391
  %v434 = vpack.c.b16 %v395, %v392
  %v435 = vpack.c.b16 %v396, %v393
  %v436 = vpack.c.b16 %v400, %v397
  %v437 = vpack.c.b16 %v401, %v398
  %v438 = vpack.c.b16 %v402, %v399
  %v439 = vpack.c.b16 %v406, %v403
  %v440 = vpack.c.b16 %v407, %v404
  %v441 = vpack.c.b16 %v408, %v405
  %v442 = vpack.c.b16 %v412, %v409
  %v443 = vpack.c.b16 %v413, %v410
  %v444 = vpack.c.b16 %v414, %v411
  %v445 = vpack.c.b16 %v418, %v415
  %v446 = vpack.c.b16 %v419, %v416
  %v447 = vpack.c.b16 %v420, %v417
  %v448 = vpack.c.b16 %v424, %v421
  %v449 = vpack.c.b16 %v425, %v422
  %v450 = vpack.c.b16 %v426, %v423
  %475 = vmatprep.subr.bf16.mxu0 %v428
  %476 = vmatpush1.bf16.msra.mxu0 %v427
  %477 = vmatprep.subr.bf16.mxu0 %v431
  %478 = vmatpush1.bf16.msra.mxu0 %v430
  %479 = vmatprep.subr.bf16.mxu0 %v434
  %480 = vmatpush1.bf16.msra.mxu0 %v433
  %481 = vmatprep.subr.bf16.mxu0 %v437
  %482 = vmatpush1.bf16.msra.mxu0 %v436
  %483 = vmatprep.subr.bf16.mxu0 %v440
  %484 = vmatpush1.bf16.msra.mxu0 %v439
  %485 = vmatprep.subr.bf16.mxu0 %v443
  %486 = vmatpush1.bf16.msra.mxu0 %v442
  %487 = vmatprep.subr.bf16.mxu0 %v446
  %488 = vmatpush1.bf16.msra.mxu0 %v445
  %489 = vmatprep.subr.bf16.mxu0 %v449
  %490 = vmatpush1.bf16.msra.mxu0 %v448
  %491 = vmatprep.subr.bf16.mxu0 0
  %492 = vmatpush1.bf16.msra.mxu0 0
  %493 = vmatprep.subr.bf16.mxu0 0
  %494 = vmatpush1.bf16.msra.mxu0 0
  %495 = vmatprep.subr.bf16.mxu0 0
  %496 = vmatpush1.bf16.msra.mxu0 0
  %497 = vmatprep.subr.bf16.mxu0 0
  %498 = vmatpush1.bf16.msra.mxu0 0
  %499 = vmatprep.subr.bf16.mxu0 0
  %500 = vmatpush1.bf16.msra.mxu0 0
  %501 = vmatprep.subr.bf16.mxu0 0
  %502 = vmatpush1.bf16.msra.mxu0 0
  %503 = vmatprep.subr.bf16.mxu0 0
  %504 = vmatpush1.bf16.msra.mxu0 0
  %505 = vmatprep.subr.bf16.mxu0 0
  %506 = vmatpush1.bf16.msra.mxu0 0
  %507 = vmatprep.mubr.bf16.mxu0 0
  %508 = vmatmul.mubr.bf16.gmra.mrb[0].mxu0 %v346
  %v509 = vpop.f32.mrb[0].mxu0
  %v510 = vadd.f32 0.0, %v509
  %v511 = vpop.f32.mrb[0].mxu0
  %v512 = vadd.f32 0.0, %v511
  %v513 = vpop.f32.mrb[0].mxu0
  %v514 = vpop.f32.mrb[0].mxu0
  %515 = vdwg.mxu0
  %516 = vmatprep.subr.bf16.mxu0 0
  %517 = vmatpush1.bf16.msra.mxu0 %v429
  %518 = vmatprep.subr.bf16.mxu0 0
  %519 = vmatpush1.bf16.msra.mxu0 %v432
  %520 = vmatprep.subr.bf16.mxu0 0
  %521 = vmatpush1.bf16.msra.mxu0 %v435
  %522 = vmatprep.subr.bf16.mxu0 0
  %523 = vmatpush1.bf16.msra.mxu0 %v438
  %524 = vmatprep.subr.bf16.mxu0 0
  %525 = vmatpush1.bf16.msra.mxu0 %v441
  %526 = vmatprep.subr.bf16.mxu0 0
  %527 = vmatpush1.bf16.msra.mxu0 %v444
  %528 = vmatprep.subr.bf16.mxu0 0
  %529 = vmatpush1.bf16.msra.mxu0 %v447
  %530 = vmatprep.subr.bf16.mxu0 0
  %531 = vmatpush1.bf16.msra.mxu0 %v450
  %532 = vmatprep.subr.bf16.mxu0 0
  %533 = vmatpush1.bf16.msra.mxu0 0
  %534 = vmatprep.subr.bf16.mxu0 0
  %535 = vmatpush1.bf16.msra.mxu0 0
  %536 = vmatprep.subr.bf16.mxu0 0
  %537 = vmatpush1.bf16.msra.mxu0 0
  %538 = vmatprep.subr.bf16.mxu0 0
  %539 = vmatpush1.bf16.msra.mxu0 0
  %540 = vmatprep.subr.bf16.mxu0 0
  %541 = vmatpush1.bf16.msra.mxu0 0
  %542 = vmatprep.subr.bf16.mxu0 0
  %543 = vmatpush1.bf16.msra.mxu0 0
  %544 = vmatprep.subr.bf16.mxu0 0
  %545 = vmatpush1.bf16.msra.mxu0 0
  %546 = vmatprep.subr.bf16.mxu0 0
  %547 = vmatpush1.bf16.msra.mxu0 0
  %548 = vmatprep.mubr.bf16.mxu0 0
  %549 = vmatmul.mubr.bf16.gmra.mrb[0].mxu0 %v346
  %v550 = vpop.f32.mrb[0].mxu0
  %v551 = vadd.f32 0.0, %v550
  %v552 = vpop.f32.mrb[0].mxu0
  %v553 = vpop.f32.mrb[0].mxu0
  %v554 = vpop.f32.mrb[0].mxu0
  %555 = vdwg.mxu0
  %v556 = vadd.f32 %v155, %v510
  %v557 = vmul.f32 %v556, 0.5
  %v558 = vtanh.pop %v557
  %v559 = vadd.f32 %v558, 1.0
  %v560 = vmul.f32 %v559, 0.5
  %v561 = vadd.f32 %v157, %v512
  %v562 = vmul.f32 %v561, 0.5
  %v563 = vtanh.pop %v562
  %v564 = vadd.f32 %v563, 1.0
  %v565 = vmul.f32 %v564, 0.5
  %v566 = vadd.f32 %v551, %v343
  %v567 = vmul.f32 %v560, %v566
  %v568 = vadd.f32 %v268, %v567
  %v569 = vtanh.pop %v568
  %v570 = vsub.f32 1.0, %v565
  %v571 = vmul.f32 %v570, %v569
  %v572 = vmul.f32 %v565, %v345
  %v573 = vadd.f32 %v571, %v572
  %v574 = vpack.c.bf16 %v573, %v573
  %575 = vmatprep.subr.bf16.mxu0 %v428
  %576 = vmatpush1.bf16.msra.mxu0 %v427
  %577 = vmatprep.subr.bf16.mxu0 %v431
  %578 = vmatpush1.bf16.msra.mxu0 %v430
  %579 = vmatprep.subr.bf16.mxu0 %v434
  %580 = vmatpush1.bf16.msra.mxu0 %v433
  %581 = vmatprep.subr.bf16.mxu0 %v437
  %582 = vmatpush1.bf16.msra.mxu0 %v436
  %583 = vmatprep.subr.bf16.mxu0 %v440
  %584 = vmatpush1.bf16.msra.mxu0 %v439
  %585 = vmatprep.subr.bf16.mxu0 %v443
  %586 = vmatpush1.bf16.msra.mxu0 %v442
  %587 = vmatprep.subr.bf16.mxu0 %v446
  %588 = vmatpush1.bf16.msra.mxu0 %v445
  %589 = vmatprep.subr.bf16.mxu0 %v449
  %590 = vmatpush1.bf16.msra.mxu0 %v448
  %591 = vmatprep.subr.bf16.mxu0 0
  %592 = vmatpush1.bf16.msra.mxu0 0
  %593 = vmatprep.subr.bf16.mxu0 0
  %594 = vmatpush1.bf16.msra.mxu0 0
  %595 = vmatprep.subr.bf16.mxu0 0
  %596 = vmatpush1.bf16.msra.mxu0 0
  %597 = vmatprep.subr.bf16.mxu0 0
  %598 = vmatpush1.bf16.msra.mxu0 0
  %599 = vmatprep.subr.bf16.mxu0 0
  %600 = vmatpush1.bf16.msra.mxu0 0
  %601 = vmatprep.subr.bf16.mxu0 0
  %602 = vmatpush1.bf16.msra.mxu0 0
  %603 = vmatprep.subr.bf16.mxu0 0
  %604 = vmatpush1.bf16.msra.mxu0 0
  %605 = vmatprep.subr.bf16.mxu0 0
  %606 = vmatpush1.bf16.msra.mxu0 0
  %607 = vmatprep.mubr.bf16.mxu0 0
  %608 = vmatmul.mubr.bf16.gmra.mrb[0].mxu0 %v574
  %v609 = vpop.f32.mrb[0].mxu0
  %v610 = vadd.f32 0.0, %v609
  %v611 = vpop.f32.mrb[0].mxu0
  %v612 = vadd.f32 0.0, %v611
  %v613 = vpop.f32.mrb[0].mxu0
  %v614 = vpop.f32.mrb[0].mxu0
  %615 = vdwg.mxu0
  %616 = vmatprep.subr.bf16.mxu0 0
  %617 = vmatpush1.bf16.msra.mxu0 %v429
  %618 = vmatprep.subr.bf16.mxu0 0
  %619 = vmatpush1.bf16.msra.mxu0 %v432
  %620 = vmatprep.subr.bf16.mxu0 0
  %621 = vmatpush1.bf16.msra.mxu0 %v435
  %622 = vmatprep.subr.bf16.mxu0 0
  %623 = vmatpush1.bf16.msra.mxu0 %v438
  %624 = vmatprep.subr.bf16.mxu0 0
  %625 = vmatpush1.bf16.msra.mxu0 %v441
  %626 = vmatprep.subr.bf16.mxu0 0
  %627 = vmatpush1.bf16.msra.mxu0 %v444
  %628 = vmatprep.subr.bf16.mxu0 0
  %629 = vmatpush1.bf16.msra.mxu0 %v447
  %630 = vmatprep.subr.bf16.mxu0 0
  %631 = vmatpush1.bf16.msra.mxu0 %v450
  %632 = vmatprep.subr.bf16.mxu0 0
  %633 = vmatpush1.bf16.msra.mxu0 0
  %634 = vmatprep.subr.bf16.mxu0 0
  %635 = vmatpush1.bf16.msra.mxu0 0
  %636 = vmatprep.subr.bf16.mxu0 0
  %637 = vmatpush1.bf16.msra.mxu0 0
  %638 = vmatprep.subr.bf16.mxu0 0
  %639 = vmatpush1.bf16.msra.mxu0 0
  %640 = vmatprep.subr.bf16.mxu0 0
  %641 = vmatpush1.bf16.msra.mxu0 0
  %642 = vmatprep.subr.bf16.mxu0 0
  %643 = vmatpush1.bf16.msra.mxu0 0
  %644 = vmatprep.subr.bf16.mxu0 0
  %645 = vmatpush1.bf16.msra.mxu0 0
  %646 = vmatprep.subr.bf16.mxu0 0
  %647 = vmatpush1.bf16.msra.mxu0 0
  %648 = vmatprep.mubr.bf16.mxu0 0
  %649 = vmatmul.mubr.bf16.gmra.mrb[0].mxu0 %v574
  %v650 = vpop.f32.mrb[0].mxu0
  %v651 = vadd.f32 0.0, %v650
  %v652 = vpop.f32.mrb[0].mxu0
  %v653 = vpop.f32.mrb[0].mxu0
  %v654 = vpop.f32.mrb[0].mxu0
  %655 = vdwg.mxu0
  %v656 = vadd.f32 %v161, %v610
  %v657 = vmul.f32 %v656, 0.5
  %v658 = vtanh.pop %v657
  %v659 = vadd.f32 %v658, 1.0
  %v660 = vmul.f32 %v659, 0.5
  %v661 = vadd.f32 %v163, %v612
  %v662 = vmul.f32 %v661, 0.5
  %v663 = vtanh.pop %v662
  %v664 = vadd.f32 %v663, 1.0
  %v665 = vmul.f32 %v664, 0.5
  %v666 = vadd.f32 %v651, %v343
  %v667 = vmul.f32 %v660, %v666
  %v668 = vadd.f32 %v273, %v667
  %v669 = vtanh.pop %v668
  %v670 = vsub.f32 1.0, %v665
  %v671 = vmul.f32 %v670, %v669
  %v672 = vmul.f32 %v665, %v573
  %v673 = vadd.f32 %v671, %v672
  %v674 = vpack.c.bf16 %v673, %v673
  %675 = vmatprep.subr.bf16.mxu0 %v428
  %676 = vmatpush1.bf16.msra.mxu0 %v427
  %677 = vmatprep.subr.bf16.mxu0 %v431
  %678 = vmatpush1.bf16.msra.mxu0 %v430
  %679 = vmatprep.subr.bf16.mxu0 %v434
  %680 = vmatpush1.bf16.msra.mxu0 %v433
  %681 = vmatprep.subr.bf16.mxu0 %v437
  %682 = vmatpush1.bf16.msra.mxu0 %v436
  %683 = vmatprep.subr.bf16.mxu0 %v440
  %684 = vmatpush1.bf16.msra.mxu0 %v439
  %685 = vmatprep.subr.bf16.mxu0 %v443
  %686 = vmatpush1.bf16.msra.mxu0 %v442
  %687 = vmatprep.subr.bf16.mxu0 %v446
  %688 = vmatpush1.bf16.msra.mxu0 %v445
  %689 = vmatprep.subr.bf16.mxu0 %v449
  %690 = vmatpush1.bf16.msra.mxu0 %v448
  %691 = vmatprep.subr.bf16.mxu0 0
  %692 = vmatpush1.bf16.msra.mxu0 0
  %693 = vmatprep.subr.bf16.mxu0 0
  %694 = vmatpush1.bf16.msra.mxu0 0
  %695 = vmatprep.subr.bf16.mxu0 0
  %696 = vmatpush1.bf16.msra.mxu0 0
  %697 = vmatprep.subr.bf16.mxu0 0
  %698 = vmatpush1.bf16.msra.mxu0 0
  %699 = vmatprep.subr.bf16.mxu0 0
  %700 = vmatpush1.bf16.msra.mxu0 0
  %701 = vmatprep.subr.bf16.mxu0 0
  %702 = vmatpush1.bf16.msra.mxu0 0
  %703 = vmatprep.subr.bf16.mxu0 0
  %704 = vmatpush1.bf16.msra.mxu0 0
  %705 = vmatprep.subr.bf16.mxu0 0
  %706 = vmatpush1.bf16.msra.mxu0 0
  %707 = vmatprep.mubr.bf16.mxu0 0
  %708 = vmatmul.mubr.bf16.gmra.mrb[0].mxu0 %v674
  %v709 = vpop.f32.mrb[0].mxu0
  %v710 = vadd.f32 0.0, %v709
  %v711 = vpop.f32.mrb[0].mxu0
  %v712 = vadd.f32 0.0, %v711
  %v713 = vpop.f32.mrb[0].mxu0
  %v714 = vpop.f32.mrb[0].mxu0
  %715 = vdwg.mxu0
  %716 = vmatprep.subr.bf16.mxu0 0
  %717 = vmatpush1.bf16.msra.mxu0 %v429
  %718 = vmatprep.subr.bf16.mxu0 0
  %719 = vmatpush1.bf16.msra.mxu0 %v432
  %720 = vmatprep.subr.bf16.mxu0 0
  %721 = vmatpush1.bf16.msra.mxu0 %v435
  %722 = vmatprep.subr.bf16.mxu0 0
  %723 = vmatpush1.bf16.msra.mxu0 %v438
  %724 = vmatprep.subr.bf16.mxu0 0
  %725 = vmatpush1.bf16.msra.mxu0 %v441
  %726 = vmatprep.subr.bf16.mxu0 0
  %727 = vmatpush1.bf16.msra.mxu0 %v444
  %728 = vmatprep.subr.bf16.mxu0 0
  %729 = vmatpush1.bf16.msra.mxu0 %v447
  %730 = vmatprep.subr.bf16.mxu0 0
  %731 = vmatpush1.bf16.msra.mxu0 %v450
  %732 = vmatprep.subr.bf16.mxu0 0
  %733 = vmatpush1.bf16.msra.mxu0 0
  %734 = vmatprep.subr.bf16.mxu0 0
  %735 = vmatpush1.bf16.msra.mxu0 0
  %736 = vmatprep.subr.bf16.mxu0 0
  %737 = vmatpush1.bf16.msra.mxu0 0
  %738 = vmatprep.subr.bf16.mxu0 0
  %739 = vmatpush1.bf16.msra.mxu0 0
  %740 = vmatprep.subr.bf16.mxu0 0
  %741 = vmatpush1.bf16.msra.mxu0 0
  %742 = vmatprep.subr.bf16.mxu0 0
  %743 = vmatpush1.bf16.msra.mxu0 0
  %744 = vmatprep.subr.bf16.mxu0 0
  %745 = vmatpush1.bf16.msra.mxu0 0
  %746 = vmatprep.subr.bf16.mxu0 0
  %747 = vmatpush1.bf16.msra.mxu0 0
  %748 = vmatprep.mubr.bf16.mxu0 0
  %749 = vmatmul.mubr.bf16.gmra.mrb[0].mxu0 %v674
  %v750 = vpop.f32.mrb[0].mxu0
  %v751 = vadd.f32 0.0, %v750
  %v752 = vpop.f32.mrb[0].mxu0
  %v753 = vpop.f32.mrb[0].mxu0
  %v754 = vpop.f32.mrb[0].mxu0
  %755 = vdwg.mxu0
  %v756 = vadd.f32 %v167, %v710
  %v757 = vmul.f32 %v756, 0.5
  %v758 = vtanh.pop %v757
  %v759 = vadd.f32 %v758, 1.0
  %v760 = vmul.f32 %v759, 0.5
  %v761 = vadd.f32 %v169, %v712
  %v762 = vmul.f32 %v761, 0.5
  %v763 = vtanh.pop %v762
  %v764 = vadd.f32 %v763, 1.0
  %v765 = vmul.f32 %v764, 0.5
  %v766 = vadd.f32 %v751, %v343
  %v767 = vmul.f32 %v760, %v766
  %v768 = vadd.f32 %v278, %v767
  %v769 = vtanh.pop %v768
  %v770 = vsub.f32 1.0, %v765
  %v771 = vmul.f32 %v770, %v769
  %v772 = vmul.f32 %v765, %v673
  %v773 = vadd.f32 %v771, %v772
  %v774 = vpack.c.bf16 %v773, %v773
  %775 = vmatprep.subr.bf16.mxu0 %v428
  %776 = vmatpush1.bf16.msra.mxu0 %v427
  %777 = vmatprep.subr.bf16.mxu0 %v431
  %778 = vmatpush1.bf16.msra.mxu0 %v430
  %779 = vmatprep.subr.bf16.mxu0 %v434
  %780 = vmatpush1.bf16.msra.mxu0 %v433
  %781 = vmatprep.subr.bf16.mxu0 %v437
  %782 = vmatpush1.bf16.msra.mxu0 %v436
  %783 = vmatprep.subr.bf16.mxu0 %v440
  %784 = vmatpush1.bf16.msra.mxu0 %v439
  %785 = vmatprep.subr.bf16.mxu0 %v443
  %786 = vmatpush1.bf16.msra.mxu0 %v442
  %787 = vmatprep.subr.bf16.mxu0 %v446
  %788 = vmatpush1.bf16.msra.mxu0 %v445
  %789 = vmatprep.subr.bf16.mxu0 %v449
  %790 = vmatpush1.bf16.msra.mxu0 %v448
  %791 = vmatprep.subr.bf16.mxu0 0
  %792 = vmatpush1.bf16.msra.mxu0 0
  %793 = vmatprep.subr.bf16.mxu0 0
  %794 = vmatpush1.bf16.msra.mxu0 0
  %795 = vmatprep.subr.bf16.mxu0 0
  %796 = vmatpush1.bf16.msra.mxu0 0
  %797 = vmatprep.subr.bf16.mxu0 0
  %798 = vmatpush1.bf16.msra.mxu0 0
  %799 = vmatprep.subr.bf16.mxu0 0
  %800 = vmatpush1.bf16.msra.mxu0 0
  %801 = vmatprep.subr.bf16.mxu0 0
  %802 = vmatpush1.bf16.msra.mxu0 0
  %803 = vmatprep.subr.bf16.mxu0 0
  %804 = vmatpush1.bf16.msra.mxu0 0
  %805 = vmatprep.subr.bf16.mxu0 0
  %806 = vmatpush1.bf16.msra.mxu0 0
  %807 = vmatprep.mubr.bf16.mxu0 0
  %808 = vmatmul.mubr.bf16.gmra.mrb[0].mxu0 %v774
  %v809 = vpop.f32.mrb[0].mxu0
  %v810 = vadd.f32 0.0, %v809
  %v811 = vpop.f32.mrb[0].mxu0
  %v812 = vadd.f32 0.0, %v811
  %v813 = vpop.f32.mrb[0].mxu0
  %v814 = vpop.f32.mrb[0].mxu0
  %815 = vdwg.mxu0
  %816 = vmatprep.subr.bf16.mxu0 0
  %817 = vmatpush1.bf16.msra.mxu0 %v429
  %818 = vmatprep.subr.bf16.mxu0 0
  %819 = vmatpush1.bf16.msra.mxu0 %v432
  %820 = vmatprep.subr.bf16.mxu0 0
  %821 = vmatpush1.bf16.msra.mxu0 %v435
  %822 = vmatprep.subr.bf16.mxu0 0
  %823 = vmatpush1.bf16.msra.mxu0 %v438
  %824 = vmatprep.subr.bf16.mxu0 0
  %825 = vmatpush1.bf16.msra.mxu0 %v441
  %826 = vmatprep.subr.bf16.mxu0 0
  %827 = vmatpush1.bf16.msra.mxu0 %v444
  %828 = vmatprep.subr.bf16.mxu0 0
  %829 = vmatpush1.bf16.msra.mxu0 %v447
  %830 = vmatprep.subr.bf16.mxu0 0
  %831 = vmatpush1.bf16.msra.mxu0 %v450
  %832 = vmatprep.subr.bf16.mxu0 0
  %833 = vmatpush1.bf16.msra.mxu0 0
  %834 = vmatprep.subr.bf16.mxu0 0
  %835 = vmatpush1.bf16.msra.mxu0 0
  %836 = vmatprep.subr.bf16.mxu0 0
  %837 = vmatpush1.bf16.msra.mxu0 0
  %838 = vmatprep.subr.bf16.mxu0 0
  %839 = vmatpush1.bf16.msra.mxu0 0
  %840 = vmatprep.subr.bf16.mxu0 0
  %841 = vmatpush1.bf16.msra.mxu0 0
  %842 = vmatprep.subr.bf16.mxu0 0
  %843 = vmatpush1.bf16.msra.mxu0 0
  %844 = vmatprep.subr.bf16.mxu0 0
  %845 = vmatpush1.bf16.msra.mxu0 0
  %846 = vmatprep.subr.bf16.mxu0 0
  %847 = vmatpush1.bf16.msra.mxu0 0
  %848 = vmatprep.mubr.bf16.mxu0 0
  %849 = vmatmul.mubr.bf16.gmra.mrb[0].mxu0 %v774
  %v850 = vpop.f32.mrb[0].mxu0
  %v851 = vadd.f32 0.0, %v850
  %v852 = vpop.f32.mrb[0].mxu0
  %v853 = vpop.f32.mrb[0].mxu0
  %v854 = vpop.f32.mrb[0].mxu0
  %855 = vdwg.mxu0
  %v856 = vadd.f32 %v173, %v810
  %v857 = vmul.f32 %v856, 0.5
  %v858 = vtanh.pop %v857
  %v859 = vadd.f32 %v858, 1.0
  %v860 = vmul.f32 %v859, 0.5
  %v861 = vadd.f32 %v175, %v812
  %v862 = vmul.f32 %v861, 0.5
  %v863 = vtanh.pop %v862
  %v864 = vadd.f32 %v863, 1.0
  %v865 = vmul.f32 %v864, 0.5
  %v866 = vadd.f32 %v851, %v343
  %v867 = vmul.f32 %v860, %v866
  %v868 = vadd.f32 %v283, %v867
  %v869 = vtanh.pop %v868
  %v870 = vsub.f32 1.0, %v865
  %v871 = vmul.f32 %v870, %v869
  %v872 = vmul.f32 %v865, %v773
  %v873 = vadd.f32 %v871, %v872
  %v874 = vpack.c.bf16 %v873, %v873
  %875 = vmatprep.subr.bf16.mxu0 %v428
  %876 = vmatpush1.bf16.msra.mxu0 %v427
  %877 = vmatprep.subr.bf16.mxu0 %v431
  %878 = vmatpush1.bf16.msra.mxu0 %v430
  %879 = vmatprep.subr.bf16.mxu0 %v434
  %880 = vmatpush1.bf16.msra.mxu0 %v433
  %881 = vmatprep.subr.bf16.mxu0 %v437
  %882 = vmatpush1.bf16.msra.mxu0 %v436
  %883 = vmatprep.subr.bf16.mxu0 %v440
  %884 = vmatpush1.bf16.msra.mxu0 %v439
  %885 = vmatprep.subr.bf16.mxu0 %v443
  %886 = vmatpush1.bf16.msra.mxu0 %v442
  %887 = vmatprep.subr.bf16.mxu0 %v446
  %888 = vmatpush1.bf16.msra.mxu0 %v445
  %889 = vmatprep.subr.bf16.mxu0 %v449
  %890 = vmatpush1.bf16.msra.mxu0 %v448
  %891 = vmatprep.subr.bf16.mxu0 0
  %892 = vmatpush1.bf16.msra.mxu0 0
  %893 = vmatprep.subr.bf16.mxu0 0
  %894 = vmatpush1.bf16.msra.mxu0 0
  %895 = vmatprep.subr.bf16.mxu0 0
  %896 = vmatpush1.bf16.msra.mxu0 0
  %897 = vmatprep.subr.bf16.mxu0 0
  %898 = vmatpush1.bf16.msra.mxu0 0
  %899 = vmatprep.subr.bf16.mxu0 0
  %900 = vmatpush1.bf16.msra.mxu0 0
  %901 = vmatprep.subr.bf16.mxu0 0
  %902 = vmatpush1.bf16.msra.mxu0 0
  %903 = vmatprep.subr.bf16.mxu0 0
  %904 = vmatpush1.bf16.msra.mxu0 0
  %905 = vmatprep.subr.bf16.mxu0 0
  %906 = vmatpush1.bf16.msra.mxu0 0
  %907 = vmatprep.mubr.bf16.mxu0 0
  %908 = vmatmul.mubr.bf16.gmra.mrb[0].mxu0 %v874
  %v909 = vpop.f32.mrb[0].mxu0
  %v910 = vadd.f32 0.0, %v909
  %v911 = vpop.f32.mrb[0].mxu0
  %v912 = vadd.f32 0.0, %v911
  %v913 = vpop.f32.mrb[0].mxu0
  %v914 = vpop.f32.mrb[0].mxu0
  %915 = vdwg.mxu0
  %916 = vmatprep.subr.bf16.mxu0 0
  %917 = vmatpush1.bf16.msra.mxu0 %v429
  %918 = vmatprep.subr.bf16.mxu0 0
  %919 = vmatpush1.bf16.msra.mxu0 %v432
  %920 = vmatprep.subr.bf16.mxu0 0
  %921 = vmatpush1.bf16.msra.mxu0 %v435
  %922 = vmatprep.subr.bf16.mxu0 0
  %923 = vmatpush1.bf16.msra.mxu0 %v438
  %924 = vmatprep.subr.bf16.mxu0 0
  %925 = vmatpush1.bf16.msra.mxu0 %v441
  %926 = vmatprep.subr.bf16.mxu0 0
  %927 = vmatpush1.bf16.msra.mxu0 %v444
  %928 = vmatprep.subr.bf16.mxu0 0
  %929 = vmatpush1.bf16.msra.mxu0 %v447
  %930 = vmatprep.subr.bf16.mxu0 0
  %931 = vmatpush1.bf16.msra.mxu0 %v450
  %932 = vmatprep.subr.bf16.mxu0 0
  %933 = vmatpush1.bf16.msra.mxu0 0
  %934 = vmatprep.subr.bf16.mxu0 0
  %935 = vmatpush1.bf16.msra.mxu0 0
  %936 = vmatprep.subr.bf16.mxu0 0
  %937 = vmatpush1.bf16.msra.mxu0 0
  %938 = vmatprep.subr.bf16.mxu0 0
  %939 = vmatpush1.bf16.msra.mxu0 0
  %940 = vmatprep.subr.bf16.mxu0 0
  %941 = vmatpush1.bf16.msra.mxu0 0
  %942 = vmatprep.subr.bf16.mxu0 0
  %943 = vmatpush1.bf16.msra.mxu0 0
  %944 = vmatprep.subr.bf16.mxu0 0
  %945 = vmatpush1.bf16.msra.mxu0 0
  %946 = vmatprep.subr.bf16.mxu0 0
  %947 = vmatpush1.bf16.msra.mxu0 0
  %948 = vmatprep.mubr.bf16.mxu0 0
  %949 = vmatmul.mubr.bf16.gmra.mrb[0].mxu0 %v874
  %v950 = vpop.f32.mrb[0].mxu0
  %v951 = vadd.f32 0.0, %v950
  %v952 = vpop.f32.mrb[0].mxu0
  %v953 = vpop.f32.mrb[0].mxu0
  %v954 = vpop.f32.mrb[0].mxu0
  %955 = vdwg.mxu0
  %v956 = vadd.f32 %v179, %v910
  %v957 = vmul.f32 %v956, 0.5
  %v958 = vtanh.pop %v957
  %v959 = vadd.f32 %v958, 1.0
  %v960 = vmul.f32 %v959, 0.5
  %v961 = vadd.f32 %v181, %v912
  %v962 = vmul.f32 %v961, 0.5
  %v963 = vtanh.pop %v962
  %v964 = vadd.f32 %v963, 1.0
  %v965 = vmul.f32 %v964, 0.5
  %v966 = vadd.f32 %v951, %v343
  %v967 = vmul.f32 %v960, %v966
  %v968 = vadd.f32 %v288, %v967
  %v969 = vtanh.pop %v968
  %v970 = vsub.f32 1.0, %v965
  %v971 = vmul.f32 %v970, %v969
  %v972 = vmul.f32 %v965, %v873
  %v973 = vadd.f32 %v971, %v972
  %v974 = vpack.c.bf16 %v973, %v973
  %975 = vmatprep.subr.bf16.mxu0 %v428
  %976 = vmatpush1.bf16.msra.mxu0 %v427
  %977 = vmatprep.subr.bf16.mxu0 %v431
  %978 = vmatpush1.bf16.msra.mxu0 %v430
  %979 = vmatprep.subr.bf16.mxu0 %v434
  %980 = vmatpush1.bf16.msra.mxu0 %v433
  %981 = vmatprep.subr.bf16.mxu0 %v437
  %982 = vmatpush1.bf16.msra.mxu0 %v436
  %983 = vmatprep.subr.bf16.mxu0 %v440
  %984 = vmatpush1.bf16.msra.mxu0 %v439
  %985 = vmatprep.subr.bf16.mxu0 %v443
  %986 = vmatpush1.bf16.msra.mxu0 %v442
  %987 = vmatprep.subr.bf16.mxu0 %v446
  %988 = vmatpush1.bf16.msra.mxu0 %v445
  %989 = vmatprep.subr.bf16.mxu0 %v449
  %990 = vmatpush1.bf16.msra.mxu0 %v448
  %991 = vmatprep.subr.bf16.mxu0 0
  %992 = vmatpush1.bf16.msra.mxu0 0
  %993 = vmatprep.subr.bf16.mxu0 0
  %994 = vmatpush1.bf16.msra.mxu0 0
  %995 = vmatprep.subr.bf16.mxu0 0
  %996 = vmatpush1.bf16.msra.mxu0 0
  %997 = vmatprep.subr.bf16.mxu0 0
  %998 = vmatpush1.bf16.msra.mxu0 0
  %999 = vmatprep.subr.bf16.mxu0 0
  %1000 = vmatpush1.bf16.msra.mxu0 0
  %1001 = vmatprep.subr.bf16.mxu0 0
  %1002 = vmatpush1.bf16.msra.mxu0 0
  %1003 = vmatprep.subr.bf16.mxu0 0
  %1004 = vmatpush1.bf16.msra.mxu0 0
  %1005 = vmatprep.subr.bf16.mxu0 0
  %1006 = vmatpush1.bf16.msra.mxu0 0
  %1007 = vmatprep.mubr.bf16.mxu0 0
  %1008 = vmatmul.mubr.bf16.gmra.mrb[0].mxu0 %v974
  %v1009 = vpop.f32.mrb[0].mxu0
  %v1010 = vadd.f32 0.0, %v1009
  %v1011 = vpop.f32.mrb[0].mxu0
  %v1012 = vadd.f32 0.0, %v1011
  %v1013 = vpop.f32.mrb[0].mxu0
  %v1014 = vpop.f32.mrb[0].mxu0
  %1015 = vdwg.mxu0
  %1016 = vmatprep.subr.bf16.mxu0 0
  %1017 = vmatpush1.bf16.msra.mxu0 %v429
  %1018 = vmatprep.subr.bf16.mxu0 0
  %1019 = vmatpush1.bf16.msra.mxu0 %v432
  %1020 = vmatprep.subr.bf16.mxu0 0
  %1021 = vmatpush1.bf16.msra.mxu0 %v435
  %1022 = vmatprep.subr.bf16.mxu0 0
  %1023 = vmatpush1.bf16.msra.mxu0 %v438
  %1024 = vmatprep.subr.bf16.mxu0 0
  %1025 = vmatpush1.bf16.msra.mxu0 %v441
  %1026 = vmatprep.subr.bf16.mxu0 0
  %1027 = vmatpush1.bf16.msra.mxu0 %v444
  %1028 = vmatprep.subr.bf16.mxu0 0
  %1029 = vmatpush1.bf16.msra.mxu0 %v447
  %1030 = vmatprep.subr.bf16.mxu0 0
  %1031 = vmatpush1.bf16.msra.mxu0 %v450
  %1032 = vmatprep.subr.bf16.mxu0 0
  %1033 = vmatpush1.bf16.msra.mxu0 0
  %1034 = vmatprep.subr.bf16.mxu0 0
  %1035 = vmatpush1.bf16.msra.mxu0 0
  %1036 = vmatprep.subr.bf16.mxu0 0
  %1037 = vmatpush1.bf16.msra.mxu0 0
  %1038 = vmatprep.subr.bf16.mxu0 0
  %1039 = vmatpush1.bf16.msra.mxu0 0
  %1040 = vmatprep.subr.bf16.mxu0 0
  %1041 = vmatpush1.bf16.msra.mxu0 0
  %1042 = vmatprep.subr.bf16.mxu0 0
  %1043 = vmatpush1.bf16.msra.mxu0 0
  %1044 = vmatprep.subr.bf16.mxu0 0
  %1045 = vmatpush1.bf16.msra.mxu0 0
  %1046 = vmatprep.subr.bf16.mxu0 0
  %1047 = vmatpush1.bf16.msra.mxu0 0
  %1048 = vmatprep.mubr.bf16.mxu0 0
  %1049 = vmatmul.mubr.bf16.gmra.mrb[0].mxu0 %v974
  %v1050 = vpop.f32.mrb[0].mxu0
  %v1051 = vadd.f32 0.0, %v1050
  %v1052 = vpop.f32.mrb[0].mxu0
  %v1053 = vpop.f32.mrb[0].mxu0
  %v1054 = vpop.f32.mrb[0].mxu0
  %1055 = vdwg.mxu0
  %v1056 = vadd.f32 %v185, %v1010
  %v1057 = vmul.f32 %v1056, 0.5
  %v1058 = vtanh.pop %v1057
  %v1059 = vadd.f32 %v1058, 1.0
  %v1060 = vmul.f32 %v1059, 0.5
  %v1061 = vadd.f32 %v187, %v1012
  %v1062 = vmul.f32 %v1061, 0.5
  %v1063 = vtanh.pop %v1062
  %v1064 = vadd.f32 %v1063, 1.0
  %v1065 = vmul.f32 %v1064, 0.5
  %v1066 = vadd.f32 %v1051, %v343
  %v1067 = vmul.f32 %v1060, %v1066
  %v1068 = vadd.f32 %v293, %v1067
  %v1069 = vtanh.pop %v1068
  %v1070 = vsub.f32 1.0, %v1065
  %v1071 = vmul.f32 %v1070, %v1069
  %v1072 = vmul.f32 %v1065, %v973
  %v1073 = vadd.f32 %v1071, %v1072
  %v1074 = vpack.c.bf16 %v1073, %v1073
  %1075 = vmatprep.subr.bf16.mxu0 %v428
  %1076 = vmatpush1.bf16.msra.mxu0 %v427
  %1077 = vmatprep.subr.bf16.mxu0 %v431
  %1078 = vmatpush1.bf16.msra.mxu0 %v430
  %1079 = vmatprep.subr.bf16.mxu0 %v434
  %1080 = vmatpush1.bf16.msra.mxu0 %v433
  %1081 = vmatprep.subr.bf16.mxu0 %v437
  %1082 = vmatpush1.bf16.msra.mxu0 %v436
  %1083 = vmatprep.subr.bf16.mxu0 %v440
  %1084 = vmatpush1.bf16.msra.mxu0 %v439
  %1085 = vmatprep.subr.bf16.mxu0 %v443
  %1086 = vmatpush1.bf16.msra.mxu0 %v442
  %1087 = vmatprep.subr.bf16.mxu0 %v446
  %1088 = vmatpush1.bf16.msra.mxu0 %v445
  %1089 = vmatprep.subr.bf16.mxu0 %v449
  %1090 = vmatpush1.bf16.msra.mxu0 %v448
  %1091 = vmatprep.subr.bf16.mxu0 0
  %1092 = vmatpush1.bf16.msra.mxu0 0
  %1093 = vmatprep.subr.bf16.mxu0 0
  %1094 = vmatpush1.bf16.msra.mxu0 0
  %1095 = vmatprep.subr.bf16.mxu0 0
  %1096 = vmatpush1.bf16.msra.mxu0 0
  %1097 = vmatprep.subr.bf16.mxu0 0
  %1098 = vmatpush1.bf16.msra.mxu0 0
  %1099 = vmatprep.subr.bf16.mxu0 0
  %1100 = vmatpush1.bf16.msra.mxu0 0
  %1101 = vmatprep.subr.bf16.mxu0 0
  %1102 = vmatpush1.bf16.msra.mxu0 0
  %1103 = vmatprep.subr.bf16.mxu0 0
  %1104 = vmatpush1.bf16.msra.mxu0 0
  %1105 = vmatprep.subr.bf16.mxu0 0
  %1106 = vmatpush1.bf16.msra.mxu0 0
  %1107 = vmatprep.mubr.bf16.mxu0 0
  %1108 = vmatmul.mubr.bf16.gmra.mrb[0].mxu0 %v1074
  %v1109 = vpop.f32.mrb[0].mxu0
  %v1110 = vadd.f32 0.0, %v1109
  %v1111 = vpop.f32.mrb[0].mxu0
  %v1112 = vadd.f32 0.0, %v1111
  %v1113 = vpop.f32.mrb[0].mxu0
  %v1114 = vpop.f32.mrb[0].mxu0
  %1115 = vdwg.mxu0
  %1116 = vmatprep.subr.bf16.mxu0 0
  %1117 = vmatpush1.bf16.msra.mxu0 %v429
  %1118 = vmatprep.subr.bf16.mxu0 0
  %1119 = vmatpush1.bf16.msra.mxu0 %v432
  %1120 = vmatprep.subr.bf16.mxu0 0
  %1121 = vmatpush1.bf16.msra.mxu0 %v435
  %1122 = vmatprep.subr.bf16.mxu0 0
  %1123 = vmatpush1.bf16.msra.mxu0 %v438
  %1124 = vmatprep.subr.bf16.mxu0 0
  %1125 = vmatpush1.bf16.msra.mxu0 %v441
  %1126 = vmatprep.subr.bf16.mxu0 0
  %1127 = vmatpush1.bf16.msra.mxu0 %v444
  %1128 = vmatprep.subr.bf16.mxu0 0
  %1129 = vmatpush1.bf16.msra.mxu0 %v447
  %1130 = vmatprep.subr.bf16.mxu0 0
  %1131 = vmatpush1.bf16.msra.mxu0 %v450
  %1132 = vmatprep.subr.bf16.mxu0 0
  %1133 = vmatpush1.bf16.msra.mxu0 0
  %1134 = vmatprep.subr.bf16.mxu0 0
  %1135 = vmatpush1.bf16.msra.mxu0 0
  %1136 = vmatprep.subr.bf16.mxu0 0
  %1137 = vmatpush1.bf16.msra.mxu0 0
  %1138 = vmatprep.subr.bf16.mxu0 0
  %1139 = vmatpush1.bf16.msra.mxu0 0
  %1140 = vmatprep.subr.bf16.mxu0 0
  %1141 = vmatpush1.bf16.msra.mxu0 0
  %1142 = vmatprep.subr.bf16.mxu0 0
  %1143 = vmatpush1.bf16.msra.mxu0 0
  %1144 = vmatprep.subr.bf16.mxu0 0
  %1145 = vmatpush1.bf16.msra.mxu0 0
  %1146 = vmatprep.subr.bf16.mxu0 0
  %1147 = vmatpush1.bf16.msra.mxu0 0
  %1148 = vmatprep.mubr.bf16.mxu0 0
  %1149 = vmatmul.mubr.bf16.gmra.mrb[0].mxu0 %v1074
  %v1150 = vpop.f32.mrb[0].mxu0
  %v1151 = vadd.f32 0.0, %v1150
  %v1152 = vpop.f32.mrb[0].mxu0
  %v1153 = vpop.f32.mrb[0].mxu0
  %v1154 = vpop.f32.mrb[0].mxu0
  %1155 = vdwg.mxu0
  %v1156 = vadd.f32 %v191, %v1110
  %v1157 = vmul.f32 %v1156, 0.5
  %v1158 = vtanh.pop %v1157
  %v1159 = vadd.f32 %v1158, 1.0
  %v1160 = vmul.f32 %v1159, 0.5
  %v1161 = vadd.f32 %v193, %v1112
  %v1162 = vmul.f32 %v1161, 0.5
  %v1163 = vtanh.pop %v1162
  %v1164 = vadd.f32 %v1163, 1.0
  %v1165 = vmul.f32 %v1164, 0.5
  %v1166 = vadd.f32 %v1151, %v343
  %v1167 = vmul.f32 %v1160, %v1166
  %v1168 = vadd.f32 %v298, %v1167
  %v1169 = vtanh.pop %v1168
  %v1170 = vsub.f32 1.0, %v1165
  %v1171 = vmul.f32 %v1170, %v1169
  %v1172 = vmul.f32 %v1165, %v1073
  %v1173 = vadd.f32 %v1171, %v1172
  %v1174 = vpack.c.bf16 %v1173, %v1173
  %1175 = vmatprep.subr.bf16.mxu0 %v428
  %1176 = vmatpush1.bf16.msra.mxu0 %v427
  %1177 = vmatprep.subr.bf16.mxu0 %v431
  %1178 = vmatpush1.bf16.msra.mxu0 %v430
  %1179 = vmatprep.subr.bf16.mxu0 %v434
  %1180 = vmatpush1.bf16.msra.mxu0 %v433
  %1181 = vmatprep.subr.bf16.mxu0 %v437
  %1182 = vmatpush1.bf16.msra.mxu0 %v436
  %1183 = vmatprep.subr.bf16.mxu0 %v440
  %1184 = vmatpush1.bf16.msra.mxu0 %v439
  %1185 = vmatprep.subr.bf16.mxu0 %v443
  %1186 = vmatpush1.bf16.msra.mxu0 %v442
  %1187 = vmatprep.subr.bf16.mxu0 %v446
  %1188 = vmatpush1.bf16.msra.mxu0 %v445
  %1189 = vmatprep.subr.bf16.mxu0 %v449
  %1190 = vmatpush1.bf16.msra.mxu0 %v448
  %1191 = vmatprep.subr.bf16.mxu0 0
  %1192 = vmatpush1.bf16.msra.mxu0 0
  %1193 = vmatprep.subr.bf16.mxu0 0
  %1194 = vmatpush1.bf16.msra.mxu0 0
  %1195 = vmatprep.subr.bf16.mxu0 0
  %1196 = vmatpush1.bf16.msra.mxu0 0
  %1197 = vmatprep.subr.bf16.mxu0 0
  %1198 = vmatpush1.bf16.msra.mxu0 0
  %1199 = vmatprep.subr.bf16.mxu0 0
  %1200 = vmatpush1.bf16.msra.mxu0 0
  %1201 = vmatprep.subr.bf16.mxu0 0
  %1202 = vmatpush1.bf16.msra.mxu0 0
  %1203 = vmatprep.subr.bf16.mxu0 0
  %1204 = vmatpush1.bf16.msra.mxu0 0
  %1205 = vmatprep.subr.bf16.mxu0 0
  %1206 = vmatpush1.bf16.msra.mxu0 0
  %1207 = vmatprep.mubr.bf16.mxu0 0
  %1208 = vmatmul.mubr.bf16.gmra.mrb[0].mxu0 %v1174
  %v1209 = vpop.f32.mrb[0].mxu0
  %v1210 = vadd.f32 0.0, %v1209
  %v1211 = vpop.f32.mrb[0].mxu0
  %v1212 = vadd.f32 0.0, %v1211
  %v1213 = vpop.f32.mrb[0].mxu0
  %v1214 = vpop.f32.mrb[0].mxu0
  %1215 = vdwg.mxu0
  %1216 = vmatprep.subr.bf16.mxu0 0
  %1217 = vmatpush1.bf16.msra.mxu0 %v429
  %1218 = vmatprep.subr.bf16.mxu0 0
  %1219 = vmatpush1.bf16.msra.mxu0 %v432
  %1220 = vmatprep.subr.bf16.mxu0 0
  %1221 = vmatpush1.bf16.msra.mxu0 %v435
  %1222 = vmatprep.subr.bf16.mxu0 0
  %1223 = vmatpush1.bf16.msra.mxu0 %v438
  %1224 = vmatprep.subr.bf16.mxu0 0
  %1225 = vmatpush1.bf16.msra.mxu0 %v441
  %1226 = vmatprep.subr.bf16.mxu0 0
  %1227 = vmatpush1.bf16.msra.mxu0 %v444
  %1228 = vmatprep.subr.bf16.mxu0 0
  %1229 = vmatpush1.bf16.msra.mxu0 %v447
  %1230 = vmatprep.subr.bf16.mxu0 0
  %1231 = vmatpush1.bf16.msra.mxu0 %v450
  %1232 = vmatprep.subr.bf16.mxu0 0
  %1233 = vmatpush1.bf16.msra.mxu0 0
  %1234 = vmatprep.subr.bf16.mxu0 0
  %1235 = vmatpush1.bf16.msra.mxu0 0
  %1236 = vmatprep.subr.bf16.mxu0 0
  %1237 = vmatpush1.bf16.msra.mxu0 0
  %1238 = vmatprep.subr.bf16.mxu0 0
  %1239 = vmatpush1.bf16.msra.mxu0 0
  %1240 = vmatprep.subr.bf16.mxu0 0
  %1241 = vmatpush1.bf16.msra.mxu0 0
  %1242 = vmatprep.subr.bf16.mxu0 0
  %1243 = vmatpush1.bf16.msra.mxu0 0
  %1244 = vmatprep.subr.bf16.mxu0 0
  %1245 = vmatpush1.bf16.msra.mxu0 0
  %1246 = vmatprep.subr.bf16.mxu0 0
  %1247 = vmatpush1.bf16.msra.mxu0 0
  %1248 = vmatprep.mubr.bf16.mxu0 0
  %1249 = vmatmul.mubr.bf16.gmra.mrb[0].mxu0 %v1174
  %v1250 = vpop.f32.mrb[0].mxu0
  %v1251 = vadd.f32 0.0, %v1250
  %v1252 = vpop.f32.mrb[0].mxu0
  %v1253 = vpop.f32.mrb[0].mxu0
  %v1254 = vpop.f32.mrb[0].mxu0
  %1255 = vdwg.mxu0
  %v1256 = vadd.f32 %v197, %v1210
  %v1257 = vmul.f32 %v1256, 0.5
  %v1258 = vtanh.pop %v1257
  %v1259 = vadd.f32 %v1258, 1.0
  %v1260 = vmul.f32 %v1259, 0.5
  %v1261 = vadd.f32 %v199, %v1212
  %v1262 = vmul.f32 %v1261, 0.5
  %v1263 = vtanh.pop %v1262
  %v1264 = vadd.f32 %v1263, 1.0
  %v1265 = vmul.f32 %v1264, 0.5
  %v1266 = vadd.f32 %v1251, %v343
  %v1267 = vmul.f32 %v1260, %v1266
  %v1268 = vadd.f32 %v303, %v1267
  %v1269 = vtanh.pop %v1268
  %v1270 = vsub.f32 1.0, %v1265
  %v1271 = vmul.f32 %v1270, %v1269
  %v1272 = vmul.f32 %v1265, %v1173
  %v1273 = vadd.f32 %v1271, %v1272
  %1274 = vst [vmem:[%s9] sm:$0xff] %v1273
  %v1275 = vld [vmem:[%s6] sm:$0xff]
  %v1276 = vld [vmem:[%s6 + $0x8] sm:$0xff]
  %v1277 = vld [vmem:[%s6 + $0x10] sm:$0xff]
  %v1278 = vld [vmem:[%s6 + $0x18] sm:$0xff]
  %v1279 = vld [vmem:[%s6 + $0x20] sm:$0xff]
  %v1280 = vld [vmem:[%s6 + $0x28] sm:$0xff]
  %v1281 = vld [vmem:[%s6 + $0x30] sm:$0xff]
  %v1282 = vld [vmem:[%s6 + $0x38] sm:$0xff]
  %v1283 = vld [vmem:[%s6 + $0x40] sm:$0xff]
  %v1284 = vld [vmem:[%s6 + $0x48] sm:$0xff]
  %v1285 = vld [vmem:[%s6 + $0x50] sm:$0xff]
  %v1286 = vld [vmem:[%s6 + $0x58] sm:$0xff]
  %v1287 = vld [vmem:[%s6 + $0x60] sm:$0xff]
  %v1288 = vld [vmem:[%s6 + $0x68] sm:$0xff]
  %v1289 = vld [vmem:[%s6 + $0x70] sm:$0xff]
  %v1290 = vld [vmem:[%s6 + $0x78] sm:$0xff]
  %v1291 = vld [vmem:[%s7] sm:$0x1]
  %v1293 = vlaneseq
  %v1294 = vshrl.u32 %v1293, 7
  %v1295 = vsub.s32 0, %v1294
  %v1296 = vrot.slane %v1291, %v1295
  %1298 = vmatprep.subr.mxu0 0.0
  %1299 = vmatpush1.msra.mxu0 %v1275
  %1300 = vmatprep.subr.mxu0 0.0
  %1301 = vmatpush1.msra.mxu0 %v1276
  %1302 = vmatprep.subr.mxu0 0.0
  %1303 = vmatpush1.msra.mxu0 %v1277
  %1304 = vmatprep.subr.mxu0 0.0
  %1305 = vmatpush1.msra.mxu0 %v1278
  %1306 = vmatprep.subr.mxu0 0.0
  %1307 = vmatpush1.msra.mxu0 %v1279
  %1308 = vmatprep.subr.mxu0 0.0
  %1309 = vmatpush1.msra.mxu0 %v1280
  %1310 = vmatprep.subr.mxu0 0.0
  %1311 = vmatpush1.msra.mxu0 %v1281
  %1312 = vmatprep.subr.mxu0 0.0
  %1313 = vmatpush1.msra.mxu0 %v1282
  %1314 = vmatprep.subr.mxu0 0.0
  %1315 = vmatpush1.msra.mxu0 %v1283
  %1316 = vmatprep.subr.mxu0 0.0
  %1317 = vmatpush1.msra.mxu0 %v1284
  %1318 = vmatprep.subr.mxu0 0.0
  %1319 = vmatpush1.msra.mxu0 %v1285
  %1320 = vmatprep.subr.mxu0 0.0
  %1321 = vmatpush1.msra.mxu0 %v1286
  %1322 = vmatprep.subr.mxu0 0.0
  %1323 = vmatpush1.msra.mxu0 %v1287
  %1324 = vmatprep.subr.mxu0 0.0
  %1325 = vmatpush1.msra.mxu0 %v1288
  %1326 = vmatprep.subr.mxu0 0.0
  %1327 = vmatpush1.msra.mxu0 %v1289
  %1328 = vmatprep.subr.mxu0 0.0
  %1329 = vmatpush1.msra.mxu0 %v1290
  %1330 = vmatprep.subr.mxu0 0.0
  %1331 = vmatpush1.msra.mxu0 0.0
  %1332 = vmatprep.subr.mxu0 0.0
  %1333 = vmatpush1.msra.mxu0 0.0
  %1334 = vmatprep.subr.mxu0 0.0
  %1335 = vmatpush1.msra.mxu0 0.0
  %1336 = vmatprep.subr.mxu0 0.0
  %1337 = vmatpush1.msra.mxu0 0.0
  %1338 = vmatprep.subr.mxu0 0.0
  %1339 = vmatpush1.msra.mxu0 0.0
  %1340 = vmatprep.subr.mxu0 0.0
  %1341 = vmatpush1.msra.mxu0 0.0
  %1342 = vmatprep.subr.mxu0 0.0
  %1343 = vmatpush1.msra.mxu0 0.0
  %1344 = vmatprep.subr.mxu0 0.0
  %1345 = vmatpush1.msra.mxu0 0.0
  %1346 = vmatprep.subr.mxu0 0.0
  %1347 = vmatpush1.msra.mxu0 0.0
  %1348 = vmatprep.subr.mxu0 0.0
  %1349 = vmatpush1.msra.mxu0 0.0
  %1350 = vmatprep.subr.mxu0 0.0
  %1351 = vmatpush1.msra.mxu0 0.0
  %1352 = vmatprep.subr.mxu0 0.0
  %1353 = vmatpush1.msra.mxu0 0.0
  %1354 = vmatprep.subr.mxu0 0.0
  %1355 = vmatpush1.msra.mxu0 0.0
  %1356 = vmatprep.subr.mxu0 0.0
  %1357 = vmatpush1.msra.mxu0 0.0
  %1358 = vmatprep.subr.mxu0 0.0
  %1359 = vmatpush1.msra.mxu0 0.0
  %1360 = vmatprep.subr.mxu0 0.0
  %1361 = vmatpush1.msra.mxu0 0.0
  %1362 = vmatprep.mubr.f32.mxu0 0.0
  %1363 = vmatmul.mubr.f32.gmra.mrb[0].mxu0 %v1273
  %v1364 = vpop.f32.mrb[0].mxu0
  %v1365 = vadd.f32 %v1296, %v1364
  %v1366 = vpop.f32.mrb[0].mxu0
  %1367 = vdwg.mxu0
  %vm1368 = vcmask 64512
  %v1369 = vsel %vm1368, %v1365, -inf
  %1370 = vmax.xlane.f32.xlu0 %v1369
  %v1371 = vpop.xlane.xlu0 %1370
  %v1372 = vsub.f32 %v1365, %v1371
  %v1373 = vmul.f32 %v1372, 1.442695
  %v1374 = vpow.pop %v1373
  %v1375 = vsel %vm1368, %v1374, 0.0
  %1376 = vadd.xlane.f32.xlu0 %v1375
  %v1377 = vpop.xlane.xlu0 %1376
  %v1378 = vlog2.pop %v1377
  %v1379 = vmul.f32 %v1378, 0.6931472
  %v1380 = vadd.f32 %v1371, %v1379
  %v1381 = vsub.f32 %v1365, %v1380
  %1382 = vst.msk [vmem:[%s8] sm:$0xff] %vm1368, %v1381
  // Predicated region
  $region34: #{gru_forward.1} parent=0 // pred_check
    _
  $region35: #{gru_forward.1} parent=0 // pred_check_branch
    %1384 = sbr.rel (0) target = $region37
  $region36: #{gru_forward.1} parent=0 // pred_region
    _
  $region37: #{gru_forward.1} parent=0 // pred_fallthru
    _
  // Predicated region
  $region38: #{gru_forward.1} parent=0 // pred_check
    _
  $region39: #{gru_forward.1} parent=0 // pred_check_branch
    %1386 = sbr.rel (0) target = $region41
  $region40: #{gru_forward.1} parent=0 // pred_region
    _
  $region41: #{gru_forward.1} parent=0 // pred_fallthru
    _
  // Predicated region
  $region42: #{gru_forward.1} parent=0 // pred_check
    _
  $region43: #{gru_forward.1} parent=0 // pred_check_branch
    %1388 = sbr.rel (0) target = $region45
  $region44: #{gru_forward.1} parent=0 // pred_region
    _
  $region45: #{gru_forward.1} parent=0 // pred_fallthru
    _
  // Predicated region
  $region46: #{gru_forward.1} parent=0 // pred_check
    _
  $region47: #{gru_forward.1} parent=0 // pred_check_branch
    %1390 = sbr.rel (0) target = $region49
  $region48: #{gru_forward.1} parent=0 // pred_region
    _
  $region49: #{gru_forward.1} parent=0 // pred_fallthru
    _

</llo_original>
